<compile_context>
chip_gen: v5e
topology: v5e:2x2
jax: 0.10.0
libtpu: 0.0.40
codegen_flags: <defaults>
</compile_context>

<pallas_src>
import functools
import math

import jax
import jax.numpy as jnp
from jax.experimental import pallas as pl
from jax.experimental.pallas import tpu as pltpu

PAD_IDX = 0
NEG_INF = -1e9

# Row layout of the packed bias / layernorm array (per layer, padded to 128 lanes):
#  0 bq1  1 bk1  2 bv1  3 bz1  4 gamma1  5 beta1      (masked self-attention)
#  6 bq2  7 bk2  8 bv2  9 bz2 10 gamma2 11 beta2      (cross attention)
# 12 bf1 13 bf2 14 gamma3 15 beta3                    (feed-forward)


# ----------------------------- in-kernel helpers -----------------------------

def _layernorm(x, gamma, beta, eps=1e-5):
    # x: (N, E) f32; gamma/beta: (1, E) f32   (matches nn.LayerNorm(emd_size), eps=1e-5)
    mu = jnp.mean(x, axis=-1, keepdims=True)
    var = jnp.mean(jnp.square(x - mu), axis=-1, keepdims=True)
    return (x - mu) * jax.lax.rsqrt(var + eps) * gamma + beta


def _mha(xq_bf, xkv_bf, wq, bq, wk, bk, wv, bv, wz, bz, mask_add,
         Sq, Skv, H, dk, dv):
    """Multi-head attention + output projection for ONE batch element.

    xq_bf: (Sq, E) bf16, xkv_bf: (Skv, E) bf16 (already cast once by the caller),
    weights bf16, biases (1, *) f32.  mask_add broadcasts against (H, Sq, Skv).
    Heads are handled with head-batched einsums (leading batch dim, same pattern as
    the flash-attention reference kernel) -- no per-head lane slices, no concatenates.
    """
    q = jnp.dot(xq_bf, wq, preferred_element_type=jnp.float32) + bq      # (Sq, H*dk)
    k = jnp.dot(xkv_bf, wk, preferred_element_type=jnp.float32) + bk     # (Skv, H*dk)
    v = jnp.dot(xkv_bf, wv, preferred_element_type=jnp.float32) + bv     # (Skv, H*dv)

    q3 = jnp.swapaxes(q.reshape(Sq, H, dk), 0, 1).astype(jnp.bfloat16)   # (H, Sq, dk)
    k3 = jnp.swapaxes(k.reshape(Skv, H, dk), 0, 1).astype(jnp.bfloat16)  # (H, Skv, dk)
    v3 = jnp.swapaxes(v.reshape(Skv, H, dv), 0, 1).astype(jnp.bfloat16)  # (H, Skv, dv)

    scale = 1.0 / math.sqrt(dk)
    s = jnp.einsum('hqd,hkd->hqk', q3, k3,
                   preferred_element_type=jnp.float32)                   # (H, Sq, Skv)
    s = s * scale + mask_add

    # One stable softmax over all heads at once.
    s = s - jnp.max(s, axis=-1, keepdims=True)
    e = jnp.exp(s)
    denom = jnp.sum(e, axis=-1, keepdims=True)
    p = (e * pl.reciprocal(denom, approx=True)).astype(jnp.bfloat16)

    z = jnp.einsum('hqk,hkd->hqd', p, v3,
                   preferred_element_type=jnp.float32)                   # (H, Sq, dv)
    z = jnp.swapaxes(z, 0, 1).reshape(Sq, H * dv)                        # (Sq, H*dv)
    z = jnp.dot(z.astype(jnp.bfloat16), wz,
                preferred_element_type=jnp.float32) + bz                 # (Sq, E)
    return z


# ----------------------- fused decoder-blocks Pallas kernel -----------------------

def fused_layers_kernel(S, Se, E, F, H, dk, dv,
                        x_ref, encz_ref, m1_ref, m2_ref,
                        wq1_ref, wk1_ref, wv1_ref, wz1_ref,
                        wq2_ref, wk2_ref, wv2_ref, wz2_ref,
                        wf1_ref, wf2_ref, bias_ref,
                        out_ref, act_ref):
    l = pl.program_id(1)
    nl = pl.num_programs(1)

    # Load this batch tile's embedded tokens into the resident activation scratch once.
    @pl.when(l == 0)
    def _():
        act_ref[...] = x_ref[...]

    act = act_ref[...]                              # (S, E) f32, carried across layers
    act_bf = act.astype(jnp.bfloat16)               # single bf16 shadow for this layer
    encz_bf = encz_ref[...].astype(jnp.bfloat16)    # (Se, E)
    bias = bias_ref[0]                              # (16, padw) f32

    HK = H * dk
    HV = H * dv

    # Masks are prebuilt (hoisted) in the wrapper: additive 0 / -1e9.
    mask_self = m1_ref[0]                           # (S, S)  causal + pad
    mask_cross = m2_ref[0]                          # (1, Se) pad only

    # Unpack per-layer bias / layernorm vectors (kept 2D (1, n) for broadcasting).
    bq1 = bias[0:1, :HK]; bk1 = bias[1:2, :HK]; bv1 = bias[2:3, :HV]
    bz1 = bias[3:4, :E];  g1 = bias[4:5, :E];   be1 = bias[5:6, :E]
    bq2 = bias[6:7, :HK]; bk2 = bias[7:8, :HK]; bv2 = bias[8:9, :HV]
    bz2 = bias[9:10, :E]; g2 = bias[10:11, :E]; be2 = bias[11:12, :E]
    bf1 = bias[12:13, :F]; bf2 = bias[13:14, :E]
    g3 = bias[14:15, :E]; be3 = bias[15:16, :E]

    # --- masked multi-head self attention + residual + layernorm ---
    z = _mha(act_bf, act_bf, wq1_ref[0], bq1, wk1_ref[0], bk1, wv1_ref[0], bv1,
             wz1_ref[0], bz1, mask_self, S, S, H, dk, dv)
    out1 = _layernorm(z + act, g1, be1)
    out1_bf = out1.astype(jnp.bfloat16)

    # --- cross attention over encoder_z + residual + layernorm ---
    z = _mha(out1_bf, encz_bf, wq2_ref[0], bq2, wk2_ref[0], bk2, wv2_ref[0], bv2,
             wz2_ref[0], bz2, mask_cross, S, Se, H, dk, dv)
    out2 = _layernorm(z + out1, g2, be2)
    out2_bf = out2.astype(jnp.bfloat16)

    # --- feed-forward (Linear -> ReLU -> Linear) + residual + layernorm ---
    h1 = jnp.maximum(
        jnp.dot(out2_bf, wf1_ref[0], preferred_element_type=jnp.float32) + bf1, 0.0)
    z = jnp.dot(h1.astype(jnp.bfloat16), wf2_ref[0],
                preferred_element_type=jnp.float32) + bf2
    new_act = _layernorm(z + out2, g3, be3)
    act_ref[...] = new_act

    # --- emit the final activation after the last decoder block ---
    @pl.when(l == nl - 1)
    def _():
        out_ref[...] = new_act


# ------------------- final projection + softmax (separate call) -------------------

def output_head_kernel(act_ref, w_ref, b_ref, out_ref):
    logits = jnp.dot(act_ref[...].astype(jnp.bfloat16), w_ref[...],
                     preferred_element_type=jnp.float32) + b_ref[...]
    logits = logits - jnp.max(logits, axis=-1, keepdims=True)            # stable softmax
    e = jnp.exp(logits)
    out_ref[...] = e / jnp.sum(e, axis=-1, keepdims=True)                # exact division


# --------------------------------- wrapper -----------------------------------

STACKED_KEYS = ("wq1", "wk1", "wv1", "wz1", "wq2", "wk2", "wv2", "wz2",
                "wf1", "wf2", "bias_pack")


def _vmem_limit_bytes():
    # ~3/4 of physical VMEM: ~96 MiB on v5e/v6e (128 MiB), ~48 MiB on v7x (64 MiB).
    try:
        cap = pltpu.get_tpu_info().vmem_capacity_bytes
    except Exception:
        cap = 64 * 1024 * 1024
    return int(min(cap * 3 // 4, 100 * 1024 * 1024))


def decoder_forward(x_tokens, encoder_z, encoder_x_tokens, params, head, dk, dv):
    B, S = x_tokens.shape
    Se = encoder_x_tokens.shape[1]
    E = params["emb"].shape[1]
    V = params["w_out"].shape[1]
    L = params["wq1"].shape[0]
    F = params["wf1"].shape[2]

    # Full additive masks, built ONCE here (hoisted out of the per-layer kernel body).
    dec_pad = jnp.where(x_tokens == PAD_IDX, NEG_INF, 0.0).astype(jnp.float32)[:, None, :]
    rows = jax.lax.broadcasted_iota(jnp.int32, (S, S), 0)
    cols = jax.lax.broadcasted_iota(jnp.int32, (S, S), 1)
    causal = jnp.where(cols > rows, NEG_INF, 0.0).astype(jnp.float32)
    mask_self = dec_pad + causal[None, :, :]                              # (B, S, S)
    mask_cross = jnp.where(encoder_x_tokens == PAD_IDX, NEG_INF,
                           0.0).astype(jnp.float32)[:, None, :]           # (B, 1, Se)

    # EmbeddingWithPosition (gather + sinusoidal PE are glue; dropout identity in eval).
    # TODO(synk): nn.Dropout omitted (inference / eval-mode behaviour).
    x = (params["emb"][x_tokens] + params["pos_enc"][None, :S, :]).astype(jnp.float32)
    x2d = x.reshape(B * S, E)
    encz2d = encoder_z.astype(jnp.float32).reshape(B * Se, E)

    kernel = functools.partial(fused_layers_kernel, S, Se, E, F, head, dk, dv)

    def layer_spec(shape):
        nd = len(shape)
        return pl.BlockSpec((1,) + tuple(shape[1:]),
                            lambda b, l, nd=nd: (l,) + (0,) * (nd - 1))

    # NOTE: the four grid-invariant inputs below never re-DMA (constant index along l);
    # pipeline_mode=pl.Buffered(1) would halve their VMEM footprint on v7x, left at the
    # default double-buffering here for portability.
    in_specs = ([pl.BlockSpec((S, E), lambda b, l: (b, 0)),        # x2d       (per batch)
                 pl.BlockSpec((Se, E), lambda b, l: (b, 0)),       # encz2d    (per batch)
                 pl.BlockSpec((1, S, S), lambda b, l: (b, 0, 0)),  # self mask (per batch)
                 pl.BlockSpec((1, 1, Se), lambda b, l: (b, 0, 0))] # cross mask(per batch)
                + [layer_spec(params[k].shape) for k in STACKED_KEYS])

    in_arrays = ([x2d, encz2d, mask_self, mask_cross]
                 + [params[k] for k in STACKED_KEYS])

    final_act = pl.pallas_call(
        kernel,
        out_shape=jax.ShapeDtypeStruct((B * S, E), jnp.float32),
        grid=(B, L),                                   # batch parallel, layers sequential
        in_specs=in_specs,
        out_specs=pl.BlockSpec((S, E), lambda b, l: (b, 0)),
        scratch_shapes=[pltpu.VMEM((S, E), jnp.float32)],
        compiler_params=pltpu.CompilerParams(
            dimension_semantics=("parallel", "arbitrary"),
            vmem_limit_bytes=_vmem_limit_bytes()),
    )(*in_arrays)

    # --- final vocab projection + softmax: separate call, lane-dense padded V ---
    Vp = ((V + 127) // 128) * 128
    w_out = params["w_out"]
    b_out = params["b_out"]
    if Vp != V:
        w_out = jnp.pad(w_out, ((0, 0), (0, Vp - V)))
        # Padded logit columns get -1e9 bias -> exp underflows to 0, real probs sum to 1.
        b_out = jnp.pad(b_out, ((0, 0), (0, Vp - V)), constant_values=NEG_INF)

    # TODO(synk): for production vocab sizes, tile this matmul/softmax over V blocks
    # (two-pass softmax) instead of holding the full (E, Vp) weight per block.
    probs_padded = pl.pallas_call(
        output_head_kernel,
        out_shape=jax.ShapeDtypeStruct((B * S, Vp), jnp.float32),
        grid=(B,),
        in_specs=[pl.BlockSpec((S, E), lambda b: (b, 0)),
                  pl.BlockSpec((E, Vp), lambda b: (0, 0)),
                  pl.BlockSpec((1, Vp), lambda b: (0, 0))],
        out_specs=pl.BlockSpec((S, Vp), lambda b: (b, 0)),
        compiler_params=pltpu.CompilerParams(
            dimension_semantics=("parallel",),
            vmem_limit_bytes=_vmem_limit_bytes()),
    )(final_act, w_out, b_out)

    return probs_padded.reshape(B, S, Vp)[:, :, :V]


# ------------------------------ parameter setup --------------------------------

def _sinusoidal_pos_encoding(seq_max_len, emd_size):
    pos = jnp.arange(seq_max_len, dtype=jnp.float32)[:, None]
    div = jnp.exp(jnp.arange(0, emd_size, 2, dtype=jnp.float32)
                  * (-math.log(10000.0) / emd_size))
    pe = jnp.zeros((seq_max_len, emd_size), jnp.float32)
    pe = pe.at[:, 0::2].set(jnp.sin(pos * div))
    pe = pe.at[:, 1::2].set(jnp.cos(pos * div))
    return pe


def init_decoder_params(key, vocab, E, n_blocks, H, dk, dv, F, seq_max_len):
    HK, HV = H * dk, H * dv
    padw = ((max(HK, HV, E, F) + 127) // 128) * 128

    def W(k, shape):
        return jax.random.normal(k, shape, jnp.float32) * 0.05

    keys = jax.random.split(key, 2 + n_blocks)
    stacks = {k: [] for k in ("wq1", "wk1", "wv1", "wz1",
                              "wq2", "wk2", "wv2", "wz2", "wf1", "wf2")}
    bias_layers = []
    for i in range(n_blocks):
        ks = jax.random.split(keys[2 + i], 10)
        stacks["wq1"].append(W(ks[0], (E, HK)))
        stacks["wk1"].append(W(ks[1], (E, HK)))
        stacks["wv1"].append(W(ks[2], (E, HV)))
        stacks["wz1"].append(W(ks[3], (HV, E)))
        stacks["wq2"].append(W(ks[4], (E, HK)))
        stacks["wk2"].append(W(ks[5], (E, HK)))
        stacks["wv2"].append(W(ks[6], (E, HV)))
        stacks["wz2"].append(W(ks[7], (HV, E)))
        stacks["wf1"].append(W(ks[8], (E, F)))
        stacks["wf2"].append(W(ks[9], (F, E)))
        # Packed bias / layernorm vectors (see row-layout comment at top of file).
        # Linear biases start at zero; layernorm gammas at one, betas at zero.
        rows = jnp.zeros((16, padw), jnp.float32)
        rows = rows.at[4, :E].set(1.0)    # gamma1
        rows = rows.at[10, :E].set(1.0)   # gamma2
        rows = rows.at[14, :E].set(1.0)   # gamma3
        bias_layers.append(rows)

    params = {
        "emb": W(keys[0], (vocab, E)),
        "pos_enc": _sinusoidal_pos_encoding(seq_max_len, E),
        "w_out": W(keys[1], (E, vocab)).astype(jnp.bfloat16),
        "b_out": jnp.zeros((1, vocab), jnp.float32),
        "bias_pack": jnp.stack(bias_layers),                         # (L, 16, padw) f32
    }
    for k, v in stacks.items():
        params[k] = jnp.stack(v).astype(jnp.bfloat16)                # (L, ...) bf16
    return params


# ----------------------------------- main ---------------------------------------

if __name__ == "__main__":
    # Small config consistent with the module's constructor.
    EN_VOCAB = 64
    EMD = 32
    N_BLOCKS = 2
    HEAD = 2
    QK = 16
    VSZ = 16
    FSZ = 64
    SEQ_MAX = 64
    B, S, SE = 2, 8, 8

    key = jax.random.PRNGKey(0)
    k_tok, k_enc_tok, k_encz, k_param = jax.random.split(key, 4)

    x_tokens = jax.random.randint(k_tok, (B, S), 0, EN_VOCAB, dtype=jnp.int32)
    x_tokens = x_tokens.at[:, -2:].set(PAD_IDX)          # some padding to exercise masks
    enc_tokens = jax.random.randint(k_enc_tok, (B, SE), 0, EN_VOCAB, dtype=jnp.int32)
    enc_tokens = enc_tokens.at[:, -1:].set(PAD_IDX)
    encoder_z = jax.random.normal(k_encz, (B, SE, EMD), jnp.float32)

    params = init_decoder_params(k_param, EN_VOCAB, EMD, N_BLOCKS, HEAD, QK, VSZ,
                                 FSZ, SEQ_MAX)

    probs = decoder_forward(x_tokens, encoder_z, enc_tokens, params, HEAD, QK, VSZ)
    probs = jax.block_until_ready(probs)

    assert probs.shape == (B, S, EN_VOCAB)
    assert bool(jnp.all(jnp.isfinite(probs)))
    assert bool(jnp.allclose(jnp.sum(probs, axis=-1), 1.0, atol=1e-4))
    print("KERNEL_OK")
</pallas_src>

<mosaic_0001>
module attributes {stable_mosaic.version = 11 : i64} {
  func.func @fused_layers_kernel(%arg0: i32, %arg1: i32, %arg2: memref<8x32xf32, #tpu.memory_space<vmem>>, %arg3: memref<8x32xf32, #tpu.memory_space<vmem>>, %arg4: memref<1x8x8xf32, #tpu.memory_space<vmem>>, %arg5: memref<1x1x8xf32, #tpu.memory_space<vmem>>, %arg6: memref<1x32x32xbf16, #tpu.memory_space<vmem>>, %arg7: memref<1x32x32xbf16, #tpu.memory_space<vmem>>, %arg8: memref<1x32x32xbf16, #tpu.memory_space<vmem>>, %arg9: memref<1x32x32xbf16, #tpu.memory_space<vmem>>, %arg10: memref<1x32x32xbf16, #tpu.memory_space<vmem>>, %arg11: memref<1x32x32xbf16, #tpu.memory_space<vmem>>, %arg12: memref<1x32x32xbf16, #tpu.memory_space<vmem>>, %arg13: memref<1x32x32xbf16, #tpu.memory_space<vmem>>, %arg14: memref<1x32x64xbf16, #tpu.memory_space<vmem>>, %arg15: memref<1x64x32xbf16, #tpu.memory_space<vmem>>, %arg16: memref<1x16x128xf32, #tpu.memory_space<vmem>>, %arg17: memref<8x32xf32, #tpu.memory_space<vmem>>, %arg18: memref<8x32xf32, #tpu.memory_space<vmem>>) attributes {dimension_semantics = [#tpu.dimension_semantics<parallel>, #tpu.dimension_semantics<arbitrary>], iteration_bounds = array<i64: 2, 2>, scalar_prefetch = 0 : i64, scratch_operands = 1 : i64, tpu.core_type = #tpu.core_type<tc>, window_params = [{transform_indices = @transform_0, window_bounds = array<i64: 8, 32>}, {transform_indices = @transform_1, window_bounds = array<i64: 8, 32>}, {transform_indices = @transform_2, window_bounds = array<i64: 1, 8, 8>}, {transform_indices = @transform_3, window_bounds = array<i64: 1, 1, 8>}, {transform_indices = @transform_4, window_bounds = array<i64: 1, 32, 32>}, {transform_indices = @transform_5, window_bounds = array<i64: 1, 32, 32>}, {transform_indices = @transform_6, window_bounds = array<i64: 1, 32, 32>}, {transform_indices = @transform_7, window_bounds = array<i64: 1, 32, 32>}, {transform_indices = @transform_8, window_bounds = array<i64: 1, 32, 32>}, {transform_indices = @transform_9, window_bounds = array<i64: 1, 32, 32>}, {transform_indices = @transform_10, window_bounds = array<i64: 1, 32, 32>}, {transform_indices = @transform_11, window_bounds = array<i64: 1, 32, 32>}, {transform_indices = @transform_12, window_bounds = array<i64: 1, 32, 64>}, {transform_indices = @transform_13, window_bounds = array<i64: 1, 64, 32>}, {transform_indices = @transform_14, window_bounds = array<i64: 1, 16, 128>}, {transform_indices = @transform_15, window_bounds = array<i64: 8, 32>}]} {
    %c0_i32 = arith.constant 0 : i32
    %0 = arith.cmpi eq, %arg1, %c0_i32 : i32
    %1 = arith.extui %0 : i1 to i32
    %c0_i32_0 = arith.constant 0 : i32
    %2 = arith.cmpi ne, %1, %c0_i32_0 : i32
    scf.if %2 {
      %c0_81 = arith.constant 0 : index
      %c0_82 = arith.constant 0 : index
      %217 = vector.load %arg2[%c0_81, %c0_82] : memref<8x32xf32, #tpu.memory_space<vmem>>, vector<8x32xf32>
      %c0_83 = arith.constant 0 : index
      %c0_84 = arith.constant 0 : index
      %218 = vector.load %arg18[%c0_83, %c0_84] : memref<8x32xf32, #tpu.memory_space<vmem>>, vector<8x32xf32>
      tpu.vector_store %arg18[%c0_83, %c0_84], %217 {strides = array<i32>} : memref<8x32xf32, #tpu.memory_space<vmem>>, vector<8x32xf32>,
    } else {
    }
    %c0 = arith.constant 0 : index
    %c0_1 = arith.constant 0 : index
    %3 = vector.load %arg18[%c0, %c0_1] : memref<8x32xf32, #tpu.memory_space<vmem>>, vector<8x32xf32>
    %4 = arith.truncf %3 : vector<8x32xf32> to vector<8x32xbf16>
    %c0_2 = arith.constant 0 : index
    %c0_3 = arith.constant 0 : index
    %5 = vector.load %arg3[%c0_2, %c0_3] : memref<8x32xf32, #tpu.memory_space<vmem>>, vector<8x32xf32>
    %6 = arith.truncf %5 : vector<8x32xf32> to vector<8x32xbf16>
    %c0_4 = arith.constant 0 : index
    %c0_5 = arith.constant 0 : index
    %c0_6 = arith.constant 0 : index
    %7 = vector.load %arg16[%c0_4, %c0_5, %c0_6] : memref<1x16x128xf32, #tpu.memory_space<vmem>>, vector<1x16x128xf32>
    %8 = vector.shape_cast %7 : vector<1x16x128xf32> to vector<16x128xf32>
    %c0_7 = arith.constant 0 : index
    %c0_8 = arith.constant 0 : index
    %c0_9 = arith.constant 0 : index
    %9 = vector.load %arg4[%c0_7, %c0_8, %c0_9] : memref<1x8x8xf32, #tpu.memory_space<vmem>>, vector<1x8x8xf32>
    %10 = vector.shape_cast %9 : vector<1x8x8xf32> to vector<8x8xf32>
    %c0_10 = arith.constant 0 : index
    %c0_11 = arith.constant 0 : index
    %c0_12 = arith.constant 0 : index
    %11 = vector.load %arg5[%c0_10, %c0_11, %c0_12] : memref<1x1x8xf32, #tpu.memory_space<vmem>>, vector<1x1x8xf32>
    %12 = vector.shape_cast %11 : vector<1x1x8xf32> to vector<1x8xf32>
    %13 = vector.extract_strided_slice %8 {offsets = [0, 0], sizes = [1, 32], strides = [1, 1]} : vector<16x128xf32> to vector<1x32xf32>
    %14 = vector.extract_strided_slice %8 {offsets = [1, 0], sizes = [1, 32], strides = [1, 1]} : vector<16x128xf32> to vector<1x32xf32>
    %15 = vector.extract_strided_slice %8 {offsets = [2, 0], sizes = [1, 32], strides = [1, 1]} : vector<16x128xf32> to vector<1x32xf32>
    %16 = vector.extract_strided_slice %8 {offsets = [3, 0], sizes = [1, 32], strides = [1, 1]} : vector<16x128xf32> to vector<1x32xf32>
    %17 = vector.extract_strided_slice %8 {offsets = [4, 0], sizes = [1, 32], strides = [1, 1]} : vector<16x128xf32> to vector<1x32xf32>
    %18 = vector.extract_strided_slice %8 {offsets = [5, 0], sizes = [1, 32], strides = [1, 1]} : vector<16x128xf32> to vector<1x32xf32>
    %19 = vector.extract_strided_slice %8 {offsets = [6, 0], sizes = [1, 32], strides = [1, 1]} : vector<16x128xf32> to vector<1x32xf32>
    %20 = vector.extract_strided_slice %8 {offsets = [7, 0], sizes = [1, 32], strides = [1, 1]} : vector<16x128xf32> to vector<1x32xf32>
    %21 = vector.extract_strided_slice %8 {offsets = [8, 0], sizes = [1, 32], strides = [1, 1]} : vector<16x128xf32> to vector<1x32xf32>
    %22 = vector.extract_strided_slice %8 {offsets = [9, 0], sizes = [1, 32], strides = [1, 1]} : vector<16x128xf32> to vector<1x32xf32>
    %23 = vector.extract_strided_slice %8 {offsets = [10, 0], sizes = [1, 32], strides = [1, 1]} : vector<16x128xf32> to vector<1x32xf32>
    %24 = vector.extract_strided_slice %8 {offsets = [11, 0], sizes = [1, 32], strides = [1, 1]} : vector<16x128xf32> to vector<1x32xf32>
    %25 = vector.extract_strided_slice %8 {offsets = [12, 0], sizes = [1, 64], strides = [1, 1]} : vector<16x128xf32> to vector<1x64xf32>
    %26 = vector.extract_strided_slice %8 {offsets = [13, 0], sizes = [1, 32], strides = [1, 1]} : vector<16x128xf32> to vector<1x32xf32>
    %27 = vector.extract_strided_slice %8 {offsets = [14, 0], sizes = [1, 32], strides = [1, 1]} : vector<16x128xf32> to vector<1x32xf32>
    %28 = vector.extract_strided_slice %8 {offsets = [15, 0], sizes = [1, 32], strides = [1, 1]} : vector<16x128xf32> to vector<1x32xf32>
    %c0_13 = arith.constant 0 : index
    %c0_14 = arith.constant 0 : index
    %c0_15 = arith.constant 0 : index
    %29 = vector.load %arg6[%c0_13, %c0_14, %c0_15] : memref<1x32x32xbf16, #tpu.memory_space<vmem>>, vector<1x32x32xbf16>
    %30 = vector.shape_cast %29 : vector<1x32x32xbf16> to vector<32x32xbf16>
    %c0_16 = arith.constant 0 : index
    %c0_17 = arith.constant 0 : index
    %c0_18 = arith.constant 0 : index
    %31 = vector.load %arg7[%c0_16, %c0_17, %c0_18] : memref<1x32x32xbf16, #tpu.memory_space<vmem>>, vector<1x32x32xbf16>
    %32 = vector.shape_cast %31 : vector<1x32x32xbf16> to vector<32x32xbf16>
    %c0_19 = arith.constant 0 : index
    %c0_20 = arith.constant 0 : index
    %c0_21 = arith.constant 0 : index
    %33 = vector.load %arg8[%c0_19, %c0_20, %c0_21] : memref<1x32x32xbf16, #tpu.memory_space<vmem>>, vector<1x32x32xbf16>
    %34 = vector.shape_cast %33 : vector<1x32x32xbf16> to vector<32x32xbf16>
    %c0_22 = arith.constant 0 : index
    %c0_23 = arith.constant 0 : index
    %c0_24 = arith.constant 0 : index
    %35 = vector.load %arg9[%c0_22, %c0_23, %c0_24] : memref<1x32x32xbf16, #tpu.memory_space<vmem>>, vector<1x32x32xbf16>
    %36 = vector.shape_cast %35 : vector<1x32x32xbf16> to vector<32x32xbf16>
    %cst = arith.constant dense<0.000000e+00> : vector<8x32xf32>
    %37 = tpu.matmul %4, %30, %cst {dimension_numbers = #tpu.dot_dimension_numbers<[1], [0], [0], [1], [0, 0, 1, 1], [], []>} : vector<8x32xbf16>, vector<32x32xbf16>, vector<8x32xf32> -> vector<8x32xf32>
    %38 = vector.broadcast %13 : vector<1x32xf32> to vector<8x32xf32>
    %39 = arith.addf %37, %38 : vector<8x32xf32>
    %cst_25 = arith.constant dense<0.000000e+00> : vector<8x32xf32>
    %40 = tpu.matmul %4, %32, %cst_25 {dimension_numbers = #tpu.dot_dimension_numbers<[1], [0], [0], [1], [0, 0, 1, 1], [], []>} : vector<8x32xbf16>, vector<32x32xbf16>, vector<8x32xf32> -> vector<8x32xf32>
    %41 = vector.broadcast %14 : vector<1x32xf32> to vector<8x32xf32>
    %42 = arith.addf %40, %41 : vector<8x32xf32>
    %cst_26 = arith.constant dense<0.000000e+00> : vector<8x32xf32>
    %43 = tpu.matmul %4, %34, %cst_26 {dimension_numbers = #tpu.dot_dimension_numbers<[1], [0], [0], [1], [0, 0, 1, 1], [], []>} : vector<8x32xbf16>, vector<32x32xbf16>, vector<8x32xf32> -> vector<8x32xf32>
    %44 = vector.broadcast %15 : vector<1x32xf32> to vector<8x32xf32>
    %45 = arith.addf %43, %44 : vector<8x32xf32>
    %46 = vector.shape_cast %39 : vector<8x32xf32> to vector<8x2x16xf32>
    %47 = tpu.transpose %46, [1, 0, 2] : vector<8x2x16xf32> -> vector<2x8x16xf32>
    %48 = arith.truncf %47 : vector<2x8x16xf32> to vector<2x8x16xbf16>
    %49 = vector.shape_cast %42 : vector<8x32xf32> to vector<8x2x16xf32>
    %50 = tpu.transpose %49, [1, 0, 2] : vector<8x2x16xf32> -> vector<2x8x16xf32>
    %51 = arith.truncf %50 : vector<2x8x16xf32> to vector<2x8x16xbf16>
    %52 = vector.shape_cast %45 : vector<8x32xf32> to vector<8x2x16xf32>
    %53 = tpu.transpose %52, [1, 0, 2] : vector<8x2x16xf32> -> vector<2x8x16xf32>
    %54 = arith.truncf %53 : vector<2x8x16xf32> to vector<2x8x16xbf16>
    "tpu.trace_start"() <{level = 10 : i32, message = "hqd,hkd->hqk"}> : () -> ()
    %cst_27 = arith.constant dense<0.000000e+00> : vector<2x8x8xf32>
    %55 = tpu.matmul %48, %51, %cst_27 {dimension_numbers = #tpu.dot_dimension_numbers<[2], [2], [1], [1], [0, 0, 0, 1, 1, 1], [0], [0]>} : vector<2x8x16xbf16>, vector<2x8x16xbf16>, vector<2x8x8xf32> -> vector<2x8x8xf32>
    "tpu.trace_stop"() : () -> ()
    %cst_28 = arith.constant 2.500000e-01 : f32
    %56 = vector.broadcast %cst_28 : f32 to vector<2x8x8xf32>
    %57 = arith.mulf %55, %56 : vector<2x8x8xf32>
    %58 = vector.shape_cast %10 : vector<8x8xf32> to vector<1x8x8xf32>
    %59 = vector.broadcast %58 : vector<1x8x8xf32> to vector<2x8x8xf32>
    %60 = arith.addf %57, %59 : vector<2x8x8xf32>
    %cst_29 = arith.constant dense<0xFF800000> : vector<2x8xf32>
    %61 = vector.multi_reduction <maximumf>, %60, %cst_29 [2] : vector<2x8x8xf32> to vector<2x8xf32>
    %62 = vector.shape_cast %61 : vector<2x8xf32> to vector<2x8x1xf32>
    %63 = vector.broadcast %62 : vector<2x8x1xf32> to vector<2x8x8xf32>
    %64 = arith.subf %60, %63 : vector<2x8x8xf32>
    %65 = math.exp %64 : vector<2x8x8xf32>
    %cst_30 = arith.constant dense<0.000000e+00> : vector<2x8xf32>
    %66 = vector.multi_reduction <add>, %65, %cst_30 [2] : vector<2x8x8xf32> to vector<2x8xf32>
    %67 = vector.shape_cast %66 : vector<2x8xf32> to vector<2x8x1xf32>
    %68 = tpu.reciprocal %67 {approx = true} : vector<2x8x1xf32> -> vector<2x8x1xf32>
    %69 = vector.broadcast %68 : vector<2x8x1xf32> to vector<2x8x8xf32>
    %70 = arith.mulf %65, %69 : vector<2x8x8xf32>
    %71 = arith.truncf %70 : vector<2x8x8xf32> to vector<2x8x8xbf16>
    "tpu.trace_start"() <{level = 10 : i32, message = "hqk,hkd->hqd"}> : () -> ()
    %cst_31 = arith.constant dense<0.000000e+00> : vector<2x8x16xf32>
    %72 = tpu.matmul %71, %54, %cst_31 {dimension_numbers = #tpu.dot_dimension_numbers<[2], [1], [1], [2], [0, 0, 0, 1, 1, 2], [0], [0]>} : vector<2x8x8xbf16>, vector<2x8x16xbf16>, vector<2x8x16xf32> -> vector<2x8x16xf32>
    "tpu.trace_stop"() : () -> ()
    %73 = tpu.transpose %72, [1, 0, 2] : vector<2x8x16xf32> -> vector<8x2x16xf32>
    %74 = vector.shape_cast %73 : vector<8x2x16xf32> to vector<8x32xf32>
    %75 = arith.truncf %74 : vector<8x32xf32> to vector<8x32xbf16>
    %cst_32 = arith.constant dense<0.000000e+00> : vector<8x32xf32>
    %76 = tpu.matmul %75, %36, %cst_32 {dimension_numbers = #tpu.dot_dimension_numbers<[1], [0], [0], [1], [0, 0, 1, 1], [], []>} : vector<8x32xbf16>, vector<32x32xbf16>, vector<8x32xf32> -> vector<8x32xf32>
    %77 = vector.broadcast %16 : vector<1x32xf32> to vector<8x32xf32>
    %78 = arith.addf %76, %77 : vector<8x32xf32>
    %79 = arith.addf %78, %3 : vector<8x32xf32>
    %cst_33 = arith.constant dense<0.000000e+00> : vector<8xf32>
    %80 = vector.multi_reduction <add>, %79, %cst_33 [1] : vector<8x32xf32> to vector<8xf32>
    %81 = vector.shape_cast %80 : vector<8xf32> to vector<8x1xf32>
    %cst_34 = arith.constant 3.200000e+01 : f32
    %82 = vector.broadcast %cst_34 : f32 to vector<8x1xf32>
    %83 = arith.divf %81, %82 : vector<8x1xf32>
    %84 = vector.broadcast %83 : vector<8x1xf32> to vector<8x32xf32>
    %85 = arith.subf %79, %84 : vector<8x32xf32>
    %86 = arith.mulf %85, %85 : vector<8x32xf32>
    %cst_35 = arith.constant dense<0.000000e+00> : vector<8xf32>
    %87 = vector.multi_reduction <add>, %86, %cst_35 [1] : vector<8x32xf32> to vector<8xf32>
    %88 = vector.shape_cast %87 : vector<8xf32> to vector<8x1xf32>
    %cst_36 = arith.constant 3.200000e+01 : f32
    %89 = vector.broadcast %cst_36 : f32 to vector<8x1xf32>
    %90 = arith.divf %88, %89 : vector<8x1xf32>
    %91 = vector.broadcast %83 : vector<8x1xf32> to vector<8x32xf32>
    %92 = arith.subf %79, %91 : vector<8x32xf32>
    %cst_37 = arith.constant 9.99999974E-6 : f32
    %93 = vector.broadcast %cst_37 : f32 to vector<8x1xf32>
    %94 = arith.addf %90, %93 : vector<8x1xf32>
    %95 = math.rsqrt %94 : vector<8x1xf32>
    %96 = vector.broadcast %95 : vector<8x1xf32> to vector<8x32xf32>
    %97 = arith.mulf %92, %96 : vector<8x32xf32>
    %98 = vector.broadcast %17 : vector<1x32xf32> to vector<8x32xf32>
    %99 = arith.mulf %97, %98 : vector<8x32xf32>
    %100 = vector.broadcast %18 : vector<1x32xf32> to vector<8x32xf32>
    %101 = arith.addf %99, %100 : vector<8x32xf32>
    %102 = arith.truncf %101 : vector<8x32xf32> to vector<8x32xbf16>
    %c0_38 = arith.constant 0 : index
    %c0_39 = arith.constant 0 : index
    %c0_40 = arith.constant 0 : index
    %103 = vector.load %arg10[%c0_38, %c0_39, %c0_40] : memref<1x32x32xbf16, #tpu.memory_space<vmem>>, vector<1x32x32xbf16>
    %104 = vector.shape_cast %103 : vector<1x32x32xbf16> to vector<32x32xbf16>
    %c0_41 = arith.constant 0 : index
    %c0_42 = arith.constant 0 : index
    %c0_43 = arith.constant 0 : index
    %105 = vector.load %arg11[%c0_41, %c0_42, %c0_43] : memref<1x32x32xbf16, #tpu.memory_space<vmem>>, vector<1x32x32xbf16>
    %106 = vector.shape_cast %105 : vector<1x32x32xbf16> to vector<32x32xbf16>
    %c0_44 = arith.constant 0 : index
    %c0_45 = arith.constant 0 : index
    %c0_46 = arith.constant 0 : index
    %107 = vector.load %arg12[%c0_44, %c0_45, %c0_46] : memref<1x32x32xbf16, #tpu.memory_space<vmem>>, vector<1x32x32xbf16>
    %108 = vector.shape_cast %107 : vector<1x32x32xbf16> to vector<32x32xbf16>
    %c0_47 = arith.constant 0 : index
    %c0_48 = arith.constant 0 : index
    %c0_49 = arith.constant 0 : index
    %109 = vector.load %arg13[%c0_47, %c0_48, %c0_49] : memref<1x32x32xbf16, #tpu.memory_space<vmem>>, vector<1x32x32xbf16>
    %110 = vector.shape_cast %109 : vector<1x32x32xbf16> to vector<32x32xbf16>
    %cst_50 = arith.constant dense<0.000000e+00> : vector<8x32xf32>
    %111 = tpu.matmul %102, %104, %cst_50 {dimension_numbers = #tpu.dot_dimension_numbers<[1], [0], [0], [1], [0, 0, 1, 1], [], []>} : vector<8x32xbf16>, vector<32x32xbf16>, vector<8x32xf32> -> vector<8x32xf32>
    %112 = vector.broadcast %19 : vector<1x32xf32> to vector<8x32xf32>
    %113 = arith.addf %111, %112 : vector<8x32xf32>
    %cst_51 = arith.constant dense<0.000000e+00> : vector<8x32xf32>
    %114 = tpu.matmul %6, %106, %cst_51 {dimension_numbers = #tpu.dot_dimension_numbers<[1], [0], [0], [1], [0, 0, 1, 1], [], []>} : vector<8x32xbf16>, vector<32x32xbf16>, vector<8x32xf32> -> vector<8x32xf32>
    %115 = vector.broadcast %20 : vector<1x32xf32> to vector<8x32xf32>
    %116 = arith.addf %114, %115 : vector<8x32xf32>
    %cst_52 = arith.constant dense<0.000000e+00> : vector<8x32xf32>
    %117 = tpu.matmul %6, %108, %cst_52 {dimension_numbers = #tpu.dot_dimension_numbers<[1], [0], [0], [1], [0, 0, 1, 1], [], []>} : vector<8x32xbf16>, vector<32x32xbf16>, vector<8x32xf32> -> vector<8x32xf32>
    %118 = vector.broadcast %21 : vector<1x32xf32> to vector<8x32xf32>
    %119 = arith.addf %117, %118 : vector<8x32xf32>
    %120 = vector.shape_cast %113 : vector<8x32xf32> to vector<8x2x16xf32>
    %121 = tpu.transpose %120, [1, 0, 2] : vector<8x2x16xf32> -> vector<2x8x16xf32>
    %122 = arith.truncf %121 : vector<2x8x16xf32> to vector<2x8x16xbf16>
    %123 = vector.shape_cast %116 : vector<8x32xf32> to vector<8x2x16xf32>
    %124 = tpu.transpose %123, [1, 0, 2] : vector<8x2x16xf32> -> vector<2x8x16xf32>
    %125 = arith.truncf %124 : vector<2x8x16xf32> to vector<2x8x16xbf16>
    %126 = vector.shape_cast %119 : vector<8x32xf32> to vector<8x2x16xf32>
    %127 = tpu.transpose %126, [1, 0, 2] : vector<8x2x16xf32> -> vector<2x8x16xf32>
    %128 = arith.truncf %127 : vector<2x8x16xf32> to vector<2x8x16xbf16>
    "tpu.trace_start"() <{level = 10 : i32, message = "hqd,hkd->hqk"}> : () -> ()
    %cst_53 = arith.constant dense<0.000000e+00> : vector<2x8x8xf32>
    %129 = tpu.matmul %122, %125, %cst_53 {dimension_numbers = #tpu.dot_dimension_numbers<[2], [2], [1], [1], [0, 0, 0, 1, 1, 1], [0], [0]>} : vector<2x8x16xbf16>, vector<2x8x16xbf16>, vector<2x8x8xf32> -> vector<2x8x8xf32>
    "tpu.trace_stop"() : () -> ()
    %cst_54 = arith.constant 2.500000e-01 : f32
    %130 = vector.broadcast %cst_54 : f32 to vector<2x8x8xf32>
    %131 = arith.mulf %129, %130 : vector<2x8x8xf32>
    %132 = vector.shape_cast %12 : vector<1x8xf32> to vector<1x1x8xf32>
    %133 = vector.broadcast %132 : vector<1x1x8xf32> to vector<2x8x8xf32>
    %134 = arith.addf %131, %133 : vector<2x8x8xf32>
    %cst_55 = arith.constant dense<0xFF800000> : vector<2x8xf32>
    %135 = vector.multi_reduction <maximumf>, %134, %cst_55 [2] : vector<2x8x8xf32> to vector<2x8xf32>
    %136 = vector.shape_cast %135 : vector<2x8xf32> to vector<2x8x1xf32>
    %137 = vector.broadcast %136 : vector<2x8x1xf32> to vector<2x8x8xf32>
    %138 = arith.subf %134, %137 : vector<2x8x8xf32>
    %139 = math.exp %138 : vector<2x8x8xf32>
    %cst_56 = arith.constant dense<0.000000e+00> : vector<2x8xf32>
    %140 = vector.multi_reduction <add>, %139, %cst_56 [2] : vector<2x8x8xf32> to vector<2x8xf32>
    %141 = vector.shape_cast %140 : vector<2x8xf32> to vector<2x8x1xf32>
    %142 = tpu.reciprocal %141 {approx = true} : vector<2x8x1xf32> -> vector<2x8x1xf32>
    %143 = vector.broadcast %142 : vector<2x8x1xf32> to vector<2x8x8xf32>
    %144 = arith.mulf %139, %143 : vector<2x8x8xf32>
    %145 = arith.truncf %144 : vector<2x8x8xf32> to vector<2x8x8xbf16>
    "tpu.trace_start"() <{level = 10 : i32, message = "hqk,hkd->hqd"}> : () -> ()
    %cst_57 = arith.constant dense<0.000000e+00> : vector<2x8x16xf32>
    %146 = tpu.matmul %145, %128, %cst_57 {dimension_numbers = #tpu.dot_dimension_numbers<[2], [1], [1], [2], [0, 0, 0, 1, 1, 2], [0], [0]>} : vector<2x8x8xbf16>, vector<2x8x16xbf16>, vector<2x8x16xf32> -> vector<2x8x16xf32>
    "tpu.trace_stop"() : () -> ()
    %147 = tpu.transpose %146, [1, 0, 2] : vector<2x8x16xf32> -> vector<8x2x16xf32>
    %148 = vector.shape_cast %147 : vector<8x2x16xf32> to vector<8x32xf32>
    %149 = arith.truncf %148 : vector<8x32xf32> to vector<8x32xbf16>
    %cst_58 = arith.constant dense<0.000000e+00> : vector<8x32xf32>
    %150 = tpu.matmul %149, %110, %cst_58 {dimension_numbers = #tpu.dot_dimension_numbers<[1], [0], [0], [1], [0, 0, 1, 1], [], []>} : vector<8x32xbf16>, vector<32x32xbf16>, vector<8x32xf32> -> vector<8x32xf32>
    %151 = vector.broadcast %22 : vector<1x32xf32> to vector<8x32xf32>
    %152 = arith.addf %150, %151 : vector<8x32xf32>
    %153 = arith.addf %152, %101 : vector<8x32xf32>
    %cst_59 = arith.constant dense<0.000000e+00> : vector<8xf32>
    %154 = vector.multi_reduction <add>, %153, %cst_59 [1] : vector<8x32xf32> to vector<8xf32>
    %155 = vector.shape_cast %154 : vector<8xf32> to vector<8x1xf32>
    %cst_60 = arith.constant 3.200000e+01 : f32
    %156 = vector.broadcast %cst_60 : f32 to vector<8x1xf32>
    %157 = arith.divf %155, %156 : vector<8x1xf32>
    %158 = vector.broadcast %157 : vector<8x1xf32> to vector<8x32xf32>
    %159 = arith.subf %153, %158 : vector<8x32xf32>
    %160 = arith.mulf %159, %159 : vector<8x32xf32>
    %cst_61 = arith.constant dense<0.000000e+00> : vector<8xf32>
    %161 = vector.multi_reduction <add>, %160, %cst_61 [1] : vector<8x32xf32> to vector<8xf32>
    %162 = vector.shape_cast %161 : vector<8xf32> to vector<8x1xf32>
    %cst_62 = arith.constant 3.200000e+01 : f32
    %163 = vector.broadcast %cst_62 : f32 to vector<8x1xf32>
    %164 = arith.divf %162, %163 : vector<8x1xf32>
    %165 = vector.broadcast %157 : vector<8x1xf32> to vector<8x32xf32>
    %166 = arith.subf %153, %165 : vector<8x32xf32>
    %cst_63 = arith.constant 9.99999974E-6 : f32
    %167 = vector.broadcast %cst_63 : f32 to vector<8x1xf32>
    %168 = arith.addf %164, %167 : vector<8x1xf32>
    %169 = math.rsqrt %168 : vector<8x1xf32>
    %170 = vector.broadcast %169 : vector<8x1xf32> to vector<8x32xf32>
    %171 = arith.mulf %166, %170 : vector<8x32xf32>
    %172 = vector.broadcast %23 : vector<1x32xf32> to vector<8x32xf32>
    %173 = arith.mulf %171, %172 : vector<8x32xf32>
    %174 = vector.broadcast %24 : vector<1x32xf32> to vector<8x32xf32>
    %175 = arith.addf %173, %174 : vector<8x32xf32>
    %176 = arith.truncf %175 : vector<8x32xf32> to vector<8x32xbf16>
    %c0_64 = arith.constant 0 : index
    %c0_65 = arith.constant 0 : index
    %c0_66 = arith.constant 0 : index
    %177 = vector.load %arg14[%c0_64, %c0_65, %c0_66] : memref<1x32x64xbf16, #tpu.memory_space<vmem>>, vector<1x32x64xbf16>
    %178 = vector.shape_cast %177 : vector<1x32x64xbf16> to vector<32x64xbf16>
    %cst_67 = arith.constant dense<0.000000e+00> : vector<8x64xf32>
    %179 = tpu.matmul %176, %178, %cst_67 {dimension_numbers = #tpu.dot_dimension_numbers<[1], [0], [0], [1], [0, 0, 1, 1], [], []>} : vector<8x32xbf16>, vector<32x64xbf16>, vector<8x64xf32> -> vector<8x64xf32>
    %180 = vector.broadcast %25 : vector<1x64xf32> to vector<8x64xf32>
    %181 = arith.addf %179, %180 : vector<8x64xf32>
    %cst_68 = arith.constant 0.000000e+00 : f32
    %182 = vector.broadcast %cst_68 : f32 to vector<8x64xf32>
    %183 = arith.maximumf %181, %182 : vector<8x64xf32>
    %184 = arith.truncf %183 : vector<8x64xf32> to vector<8x64xbf16>
    %c0_69 = arith.constant 0 : index
    %c0_70 = arith.constant 0 : index
    %c0_71 = arith.constant 0 : index
    %185 = vector.load %arg15[%c0_69, %c0_70, %c0_71] : memref<1x64x32xbf16, #tpu.memory_space<vmem>>, vector<1x64x32xbf16>
    %186 = vector.shape_cast %185 : vector<1x64x32xbf16> to vector<64x32xbf16>
    %cst_72 = arith.constant dense<0.000000e+00> : vector<8x32xf32>
    %187 = tpu.matmul %184, %186, %cst_72 {dimension_numbers = #tpu.dot_dimension_numbers<[1], [0], [0], [1], [0, 0, 1, 1], [], []>} : vector<8x64xbf16>, vector<64x32xbf16>, vector<8x32xf32> -> vector<8x32xf32>
    %188 = vector.broadcast %26 : vector<1x32xf32> to vector<8x32xf32>
    %189 = arith.addf %187, %188 : vector<8x32xf32>
    %190 = arith.addf %189, %175 : vector<8x32xf32>
    %cst_73 = arith.constant dense<0.000000e+00> : vector<8xf32>
    %191 = vector.multi_reduction <add>, %190, %cst_73 [1] : vector<8x32xf32> to vector<8xf32>
    %192 = vector.shape_cast %191 : vector<8xf32> to vector<8x1xf32>
    %cst_74 = arith.constant 3.200000e+01 : f32
    %193 = vector.broadcast %cst_74 : f32 to vector<8x1xf32>
    %194 = arith.divf %192, %193 : vector<8x1xf32>
    %195 = vector.broadcast %194 : vector<8x1xf32> to vector<8x32xf32>
    %196 = arith.subf %190, %195 : vector<8x32xf32>
    %197 = arith.mulf %196, %196 : vector<8x32xf32>
    %cst_75 = arith.constant dense<0.000000e+00> : vector<8xf32>
    %198 = vector.multi_reduction <add>, %197, %cst_75 [1] : vector<8x32xf32> to vector<8xf32>
    %199 = vector.shape_cast %198 : vector<8xf32> to vector<8x1xf32>
    %cst_76 = arith.constant 3.200000e+01 : f32
    %200 = vector.broadcast %cst_76 : f32 to vector<8x1xf32>
    %201 = arith.divf %199, %200 : vector<8x1xf32>
    %202 = vector.broadcast %194 : vector<8x1xf32> to vector<8x32xf32>
    %203 = arith.subf %190, %202 : vector<8x32xf32>
    %cst_77 = arith.constant 9.99999974E-6 : f32
    %204 = vector.broadcast %cst_77 : f32 to vector<8x1xf32>
    %205 = arith.addf %201, %204 : vector<8x1xf32>
    %206 = math.rsqrt %205 : vector<8x1xf32>
    %207 = vector.broadcast %206 : vector<8x1xf32> to vector<8x32xf32>
    %208 = arith.mulf %203, %207 : vector<8x32xf32>
    %209 = vector.broadcast %27 : vector<1x32xf32> to vector<8x32xf32>
    %210 = arith.mulf %208, %209 : vector<8x32xf32>
    %211 = vector.broadcast %28 : vector<1x32xf32> to vector<8x32xf32>
    %212 = arith.addf %210, %211 : vector<8x32xf32>
    %c0_78 = arith.constant 0 : index
    %c0_79 = arith.constant 0 : index
    %213 = vector.load %arg18[%c0_78, %c0_79] : memref<8x32xf32, #tpu.memory_space<vmem>>, vector<8x32xf32>
    tpu.vector_store %arg18[%c0_78, %c0_79], %212 {strides = array<i32>} : memref<8x32xf32, #tpu.memory_space<vmem>>, vector<8x32xf32>,
    %c1_i32 = arith.constant 1 : i32
    %214 = arith.cmpi eq, %arg1, %c1_i32 : i32
    %215 = arith.extui %214 : i1 to i32
    %c0_i32_80 = arith.constant 0 : i32
    %216 = arith.cmpi ne, %215, %c0_i32_80 : i32
    scf.if %216 {
      %c0_81 = arith.constant 0 : index
      %c0_82 = arith.constant 0 : index
      %217 = vector.load %arg17[%c0_81, %c0_82] : memref<8x32xf32, #tpu.memory_space<vmem>>, vector<8x32xf32>
      tpu.vector_store %arg17[%c0_81, %c0_82], %212 {strides = array<i32>} : memref<8x32xf32, #tpu.memory_space<vmem>>, vector<8x32xf32>,
    } else {
    }
    return
  }
  func.func @transform_0(%arg0: i32, %arg1: i32) -> (i32, i32) {
    %c0_i32 = arith.constant 0 : i32
    %c0_i32_0 = arith.constant 0 : i32
    return %arg0, %c0_i32 : i32, i32
  }
  func.func @transform_1(%arg0: i32, %arg1: i32) -> (i32, i32) {
    %c0_i32 = arith.constant 0 : i32
    %c0_i32_0 = arith.constant 0 : i32
    return %arg0, %c0_i32 : i32, i32
  }
  func.func @transform_2(%arg0: i32, %arg1: i32) -> (i32, i32, i32) {
    %c0_i32 = arith.constant 0 : i32
    %c0_i32_0 = arith.constant 0 : i32
    %c0_i32_1 = arith.constant 0 : i32
    return %arg0, %c0_i32, %c0_i32_0 : i32, i32, i32
  }
  func.func @transform_3(%arg0: i32, %arg1: i32) -> (i32, i32, i32) {
    %c0_i32 = arith.constant 0 : i32
    %c0_i32_0 = arith.constant 0 : i32
    %c0_i32_1 = arith.constant 0 : i32
    return %arg0, %c0_i32, %c0_i32_0 : i32, i32, i32
  }
  func.func @transform_4(%arg0: i32, %arg1: i32) -> (i32, i32, i32) {
    %c0_i32 = arith.constant 0 : i32
    %c0_i32_0 = arith.constant 0 : i32
    %c0_i32_1 = arith.constant 0 : i32
    return %arg1, %c0_i32, %c0_i32_0 : i32, i32, i32
  }
  func.func @transform_5(%arg0: i32, %arg1: i32) -> (i32, i32, i32) {
    %c0_i32 = arith.constant 0 : i32
    %c0_i32_0 = arith.constant 0 : i32
    %c0_i32_1 = arith.constant 0 : i32
    return %arg1, %c0_i32, %c0_i32_0 : i32, i32, i32
  }
  func.func @transform_6(%arg0: i32, %arg1: i32) -> (i32, i32, i32) {
    %c0_i32 = arith.constant 0 : i32
    %c0_i32_0 = arith.constant 0 : i32
    %c0_i32_1 = arith.constant 0 : i32
    return %arg1, %c0_i32, %c0_i32_0 : i32, i32, i32
  }
  func.func @transform_7(%arg0: i32, %arg1: i32) -> (i32, i32, i32) {
    %c0_i32 = arith.constant 0 : i32
    %c0_i32_0 = arith.constant 0 : i32
    %c0_i32_1 = arith.constant 0 : i32
    return %arg1, %c0_i32, %c0_i32_0 : i32, i32, i32
  }
  func.func @transform_8(%arg0: i32, %arg1: i32) -> (i32, i32, i32) {
    %c0_i32 = arith.constant 0 : i32
    %c0_i32_0 = arith.constant 0 : i32
    %c0_i32_1 = arith.constant 0 : i32
    return %arg1, %c0_i32, %c0_i32_0 : i32, i32, i32
  }
  func.func @transform_9(%arg0: i32, %arg1: i32) -> (i32, i32, i32) {
    %c0_i32 = arith.constant 0 : i32
    %c0_i32_0 = arith.constant 0 : i32
    %c0_i32_1 = arith.constant 0 : i32
    return %arg1, %c0_i32, %c0_i32_0 : i32, i32, i32
  }
  func.func @transform_10(%arg0: i32, %arg1: i32) -> (i32, i32, i32) {
    %c0_i32 = arith.constant 0 : i32
    %c0_i32_0 = arith.constant 0 : i32
    %c0_i32_1 = arith.constant 0 : i32
    return %arg1, %c0_i32, %c0_i32_0 : i32, i32, i32
  }
  func.func @transform_11(%arg0: i32, %arg1: i32) -> (i32, i32, i32) {
    %c0_i32 = arith.constant 0 : i32
    %c0_i32_0 = arith.constant 0 : i32
    %c0_i32_1 = arith.constant 0 : i32
    return %arg1, %c0_i32, %c0_i32_0 : i32, i32, i32
  }
  func.func @transform_12(%arg0: i32, %arg1: i32) -> (i32, i32, i32) {
    %c0_i32 = arith.constant 0 : i32
    %c0_i32_0 = arith.constant 0 : i32
    %c0_i32_1 = arith.constant 0 : i32
    return %arg1, %c0_i32, %c0_i32_0 : i32, i32, i32
  }
  func.func @transform_13(%arg0: i32, %arg1: i32) -> (i32, i32, i32) {
    %c0_i32 = arith.constant 0 : i32
    %c0_i32_0 = arith.constant 0 : i32
    %c0_i32_1 = arith.constant 0 : i32
    return %arg1, %c0_i32, %c0_i32_0 : i32, i32, i32
  }
  func.func @transform_14(%arg0: i32, %arg1: i32) -> (i32, i32, i32) {
    %c0_i32 = arith.constant 0 : i32
    %c0_i32_0 = arith.constant 0 : i32
    %c0_i32_1 = arith.constant 0 : i32
    return %arg1, %c0_i32, %c0_i32_0 : i32, i32, i32
  }
  func.func @transform_15(%arg0: i32, %arg1: i32) -> (i32, i32) {
    %c0_i32 = arith.constant 0 : i32
    %c0_i32_0 = arith.constant 0 : i32
    return %arg0, %c0_i32 : i32, i32
  }
}

</mosaic_0001>

<llo_original>
// kernel: tpu_custom_call.1
$region0: #{tpu_custom_call.1}
  #allocation0 [shape = 'u32[]', space=smem, size = 0x4, offset = 0x4, fixed_abs, tag = 'smem constant byte address 0x4 - core index']
  #allocation1 [shape = 'u32[72,128]{1,0:T(1,128)}', space=vmem, size = 0x9000, scoped, tag = 'internal scratch']
  #allocation2 [shape = 'f32[8,32]{1,0:T(8,128)}', space=vmem, size = 0x1000, scoped, tag = 'scratch operand']
  %s0 = inlined_call_operand.hbm [shape: f32[16,32], index: 0, kind: input, shape index: {}]
  %s1 = inlined_call_operand.hbm [shape: f32[16,32], index: 1, kind: input, shape index: {}]
  %s2 = inlined_call_operand.hbm [shape: f32[2,8,8], index: 2, kind: input, shape index: {}]
  %s3 = inlined_call_operand.hbm [shape: f32[2,1,8], index: 3, kind: input, shape index: {}]
  %s4 = inlined_call_operand.vmem [shape: bf16[2,32,32], index: 4, kind: input, shape index: {}]
  %s5 = inlined_call_operand.vmem [shape: bf16[2,32,32], index: 5, kind: input, shape index: {}]
  %s6 = inlined_call_operand.vmem [shape: bf16[2,32,32], index: 6, kind: input, shape index: {}]
  %s7 = inlined_call_operand.hbm [shape: bf16[2,32,32], index: 7, kind: input, shape index: {}]
  %s8 = inlined_call_operand.hbm [shape: bf16[2,32,32], index: 8, kind: input, shape index: {}]
  %s9 = inlined_call_operand.hbm [shape: bf16[2,32,32], index: 9, kind: input, shape index: {}]
  %s10 = inlined_call_operand.hbm [shape: bf16[2,32,32], index: 10, kind: input, shape index: {}]
  %s11 = inlined_call_operand.hbm [shape: bf16[2,32,32], index: 11, kind: input, shape index: {}]
  %s12 = inlined_call_operand.hbm [shape: bf16[2,32,64], index: 12, kind: input, shape index: {}]
  %s13 = inlined_call_operand.vmem [shape: bf16[2,64,32], index: 13, kind: input, shape index: {}]
  %s14 = inlined_call_operand.hbm [shape: f32[2,16,128], index: 14, kind: input, shape index: {}]
  %s15 = inlined_call_operand.hbm [shape: f32[16,32], index: 15, kind: output, shape index: {}]
  %s16 = sld [smem:[#allocation0]]
  $region145: #{tpu_custom_call.1} parent=0
    _
  %s18 = ssub.s32 1, %s16
  %s19 = scalar_select 0, %s18, %s16
  $region1: #{tpu_custom_call.1} parent=0
    #allocation3 [shape = 'u8[8192]{0}', space=vmem, size = 0x2000, scoped, tag = 'input window, operand 0']
    #allocation4 [shape = 's32[2]{0}', space=sflag, size = 0x8, scoped, tag = 'scoped memory for tpu_custom_call.1']
    #allocation5 [shape = 's32[2]{0}', space=sflag, size = 0x8, scoped, tag = 'scoped memory for tpu_custom_call.1']
    #allocation6 [shape = 'u8[8192]{0}', space=vmem, size = 0x2000, scoped, tag = 'input window, operand 1']
    #allocation7 [shape = 's32[2]{0}', space=sflag, size = 0x8, scoped, tag = 'scoped memory for tpu_custom_call.1']
    #allocation8 [shape = 'u8[8192]{0}', space=vmem, size = 0x2000, scoped, tag = 'input window, operand 2']
    #allocation9 [shape = 'u8[1024]{0}', space=vmem, size = 0x400, scoped, tag = 'input window, operand 3']
    #allocation10 [shape = 's32[2]{0}', space=sflag, size = 0x8, scoped, tag = 'scoped memory for tpu_custom_call.1']
    #allocation11 [shape = 'u8[16384]{0}', space=vmem, size = 0x4000, scoped, tag = 'input window, operand 7']
    #allocation12 [shape = 'u8[16384]{0}', space=vmem, size = 0x4000, scoped, tag = 'input window, operand 8']
    #allocation13 [shape = 's32[2]{0}', space=sflag, size = 0x8, scoped, tag = 'scoped memory for tpu_custom_call.1']
    #allocation14 [shape = 'u8[16384]{0}', space=vmem, size = 0x4000, scoped, tag = 'input window, operand 9']
    #allocation15 [shape = 'u8[16384]{0}', space=vmem, size = 0x4000, scoped, tag = 'input window, operand 10']
    #allocation16 [shape = 's32[2]{0}', space=sflag, size = 0x8, scoped, tag = 'scoped memory for tpu_custom_call.1']
    #allocation17 [shape = 'u8[16384]{0}', space=vmem, size = 0x4000, scoped, tag = 'input window, operand 11']
    #allocation18 [shape = 'u8[16384]{0}', space=vmem, size = 0x4000, scoped, tag = 'input window, operand 12']
    #allocation19 [shape = 's32[2]{0}', space=sflag, size = 0x8, scoped, tag = 'scoped memory for tpu_custom_call.1']
    #allocation20 [shape = 'u8[16384]{0}', space=vmem, size = 0x4000, scoped, tag = 'input window, operand 14']
    #allocation21 [shape = 'u8[8192]{0}', space=vmem, size = 0x2000, scoped, tag = 'output window, operand 0']
    %20 = vsyncpa [#allocation4], 0
    %s21 = scalar_lea.sflag [#allocation4], 1
    %22 = vsyncpa %s21, 0
    %23 = vsyncpa [#allocation7], 0
    %s24 = scalar_lea.sflag [#allocation7], 1
    %25 = vsyncpa %s24, 0
    %26 = vsyncpa [#allocation10], 0
    %s27 = scalar_lea.sflag [#allocation10], 1
    %28 = vsyncpa %s27, 0
    %29 = vsyncpa [#allocation13], 0
    %s30 = scalar_lea.sflag [#allocation13], 1
    %31 = vsyncpa %s30, 0
    %32 = vsyncpa [#allocation16], 0
    %s33 = scalar_lea.sflag [#allocation16], 1
    %34 = vsyncpa %s33, 0
    %35 = vsyncpa [#allocation19], 0
    %s36 = scalar_lea.sflag [#allocation19], 1
    %37 = vsyncpa %s36, 0
    %38 = vsyncpa [#allocation5], 0
    %s39 = scalar_lea.sflag [#allocation5], 1
    %40 = vsyncpa %s39, 0
    loop: start=0, step=1, limit=6
    $region2: #{tpu_custom_call.1} parent=1 // loop_pre_header
      _
    $region3: #{tpu_custom_call.1} parent=1 // loop_header
      %s42 = sphi 0, %s46
      %p43 = scmp.ge.s32.totalorder %s42, 6
      %s49 = sphi 0, %s61
      %s50 = sphi 0, %s57
      %s51 = sphi 0, %s49
      %s52 = sphi 0, %s50
      %s53 = sphi 0, %s51
      %s54 = sphi 0, %s52
      %s64 = sphi 0, %s66
      %s67 = sphi 0, %s64
      %s68 = sphi 0, %s67
      %s84 = sphi 0, %s68
      %s90 = sphi 0, %s92
      %s93 = sphi 0, %s90
      %s94 = sphi 0, %s93
      %s110 = sphi 0, %s94
      %s116 = sphi 0, %s118
      %s119 = sphi 0, %s116
      %s120 = sphi 0, %s119
      %s136 = sphi 0, %s120
      %s142 = sphi 0, %s144
      %s145 = sphi 0, %s142
      %s146 = sphi 0, %s145
      %s162 = sphi 0, %s146
      %s168 = sphi 0, %s170
      %s171 = sphi 0, %s168
      %s172 = sphi 0, %s171
      %s188 = sphi 0, %s172
      %s194 = sphi 0, %s196
      %s197 = sphi 0, %s194
      %s198 = sphi 0, %s197
      %s214 = sphi 0, %s198
      %s220 = sphi 0, %s222
      %s223 = sphi 0, %s220
      %s224 = sphi 0, %s223
      %s240 = sphi 0, %s224
      %s246 = sphi 0, %s248
      %s249 = sphi 0, %s246
      %s250 = sphi 0, %s249
      %s266 = sphi 0, %s250
      %s272 = sphi 0, %s274
      %s275 = sphi 0, %s272
      %s276 = sphi 0, %s275
      %s292 = sphi 0, %s276
      %s298 = sphi 0, %s300
      %s301 = sphi 0, %s298
      %s302 = sphi 0, %s301
      %s318 = sphi 0, %s302
      %s324 = sphi 0, %s326
      %s327 = sphi 0, %s324
      %s328 = sphi 0, %s327
      %s344 = sphi 0, %s328
      %s350 = sphi 0, %s352
      %s353 = sphi 0, %s350
      %s354 = sphi 0, %s353
      %s370 = sphi 0, %s354
      %s376 = sphi 0, %s378
      %s379 = sphi 0, %s376
      %s380 = sphi 0, %s379
      %s396 = sphi 0, %s380
      %s402 = sphi 0, %s404
      %s405 = sphi 0, %s402
      %s406 = sphi 0, %s405
      %s422 = sphi 0, %s406
      %s428 = sphi 0, %s430
      %s431 = sphi 0, %s428
      %s432 = sphi 0, %s431
      %s448 = sphi 0, %s432
      %s454 = sphi 0, %s456
      %s457 = sphi 0, %s454
      %s458 = sphi 0, %s457
      %s474 = sphi 0, %s458
    $region4: #{tpu_custom_call.1} parent=1 // loop_header_branch
      %45 = sbr.rel (%p43) target = $region8
    $region5: #{tpu_custom_call.1} parent=1 // loop_body
      %s47 = ssub.s32 %s42, 1
      %s48 = ssub.s32 %s42, 2
      %s55 = sadd.s32 1, %s50
      %p56 = scmp.ge.s32.totalorder %s55, 2
      %s57 = scalar_select %p56, 0, %s55
      %s58 = sadd.s32 1, %s49
      %s59 = scalar_select %p56, %s58, %s49
      %p60 = scmp.ge.s32.totalorder %s59, 2
      %s61 = scalar_select %p60, 0, %s59
      %s62 = ssub.s32 %s49, %s61
      %p63 = scmp.eq.s32.totalorder %s62, 0
      %s65 = sadd.s32 %s64, 1
      %s66 = scalar_select %p63, %s64, %s65
      %p69 = pneg %p63
      %p70 = scmp.eq.s32.totalorder %s42, 3
      %p71 = por %p69, %p70
      %p72 = scmp.ne.s32.totalorder %s64, %s67
      %p73 = scmp.eq.s32.totalorder %s42, 0
      %p74 = por %p72, %p73
      %p75 = scmp.ne.s32.totalorder %s64, %s67
      %p76 = scmp.eq.s32.totalorder %s47, 3
      %p77 = por %p75, %p76
      %p78 = scmp.ne.s32.totalorder %s67, %s68
      %p79 = scmp.eq.s32.totalorder %s47, 0
      %p80 = por %p78, %p79
      %p81 = scmp.ne.s32.totalorder %s67, %s68
      %p82 = scmp.eq.s32.totalorder %s48, 3
      %p83 = por %p81, %p82
      %p85 = scmp.ne.s32.totalorder %s68, %s84
      %p86 = scmp.eq.s32.totalorder %s48, 0
      %p87 = por %p85, %p86
      %s88 = ssub.s32 %s49, %s61
      %p89 = scmp.eq.s32.totalorder %s88, 0
      %s91 = sadd.s32 %s90, 1
      %s92 = scalar_select %p89, %s90, %s91
      %p95 = pneg %p89
      %p96 = scmp.eq.s32.totalorder %s42, 3
      %p97 = por %p95, %p96
      %p98 = scmp.ne.s32.totalorder %s90, %s93
      %p99 = scmp.eq.s32.totalorder %s42, 0
      %p100 = por %p98, %p99
      %p101 = scmp.ne.s32.totalorder %s90, %s93
      %p102 = scmp.eq.s32.totalorder %s47, 3
      %p103 = por %p101, %p102
      %p104 = scmp.ne.s32.totalorder %s93, %s94
      %p105 = scmp.eq.s32.totalorder %s47, 0
      %p106 = por %p104, %p105
      %p107 = scmp.ne.s32.totalorder %s93, %s94
      %p108 = scmp.eq.s32.totalorder %s48, 3
      %p109 = por %p107, %p108
      %p111 = scmp.ne.s32.totalorder %s94, %s110
      %p112 = scmp.eq.s32.totalorder %s48, 0
      %p113 = por %p111, %p112
      %s114 = ssub.s32 %s49, %s61
      %p115 = scmp.eq.s32.totalorder %s114, 0
      %s117 = sadd.s32 %s116, 1
      %s118 = scalar_select %p115, %s116, %s117
      %p121 = pneg %p115
      %p122 = scmp.eq.s32.totalorder %s42, 3
      %p123 = por %p121, %p122
      %p124 = scmp.ne.s32.totalorder %s116, %s119
      %p125 = scmp.eq.s32.totalorder %s42, 0
      %p126 = por %p124, %p125
      %p127 = scmp.ne.s32.totalorder %s116, %s119
      %p128 = scmp.eq.s32.totalorder %s47, 3
      %p129 = por %p127, %p128
      %p130 = scmp.ne.s32.totalorder %s119, %s120
      %p131 = scmp.eq.s32.totalorder %s47, 0
      %p132 = por %p130, %p131
      %p133 = scmp.ne.s32.totalorder %s119, %s120
      %p134 = scmp.eq.s32.totalorder %s48, 3
      %p135 = por %p133, %p134
      %p137 = scmp.ne.s32.totalorder %s120, %s136
      %p138 = scmp.eq.s32.totalorder %s48, 0
      %p139 = por %p137, %p138
      %s140 = ssub.s32 %s49, %s61
      %p141 = scmp.eq.s32.totalorder %s140, 0
      %s143 = sadd.s32 %s142, 1
      %s144 = scalar_select %p141, %s142, %s143
      %p147 = pneg %p141
      %p148 = scmp.eq.s32.totalorder %s42, 3
      %p149 = por %p147, %p148
      %p150 = scmp.ne.s32.totalorder %s142, %s145
      %p151 = scmp.eq.s32.totalorder %s42, 0
      %p152 = por %p150, %p151
      %p153 = scmp.ne.s32.totalorder %s142, %s145
      %p154 = scmp.eq.s32.totalorder %s47, 3
      %p155 = por %p153, %p154
      %p156 = scmp.ne.s32.totalorder %s145, %s146
      %p157 = scmp.eq.s32.totalorder %s47, 0
      %p158 = por %p156, %p157
      %p159 = scmp.ne.s32.totalorder %s145, %s146
      %p160 = scmp.eq.s32.totalorder %s48, 3
      %p161 = por %p159, %p160
      %p163 = scmp.ne.s32.totalorder %s146, %s162
      %p164 = scmp.eq.s32.totalorder %s48, 0
      %p165 = por %p163, %p164
      %s166 = ssub.s32 %s50, %s57
      %p167 = scmp.eq.s32.totalorder %s166, 0
      %s169 = sadd.s32 %s168, 1
      %s170 = scalar_select %p167, %s168, %s169
      %p173 = pneg %p167
      %p174 = scmp.eq.s32.totalorder %s42, 3
      %p175 = por %p173, %p174
      %p176 = scmp.ne.s32.totalorder %s168, %s171
      %p177 = scmp.eq.s32.totalorder %s42, 0
      %p178 = por %p176, %p177
      %p179 = scmp.ne.s32.totalorder %s168, %s171
      %p180 = scmp.eq.s32.totalorder %s47, 3
      %p181 = por %p179, %p180
      %p182 = scmp.ne.s32.totalorder %s171, %s172
      %p183 = scmp.eq.s32.totalorder %s47, 0
      %p184 = por %p182, %p183
      %p185 = scmp.ne.s32.totalorder %s171, %s172
      %p186 = scmp.eq.s32.totalorder %s48, 3
      %p187 = por %p185, %p186
      %p189 = scmp.ne.s32.totalorder %s172, %s188
      %p190 = scmp.eq.s32.totalorder %s48, 0
      %p191 = por %p189, %p190
      %s192 = ssub.s32 %s50, %s57
      %p193 = scmp.eq.s32.totalorder %s192, 0
      %s195 = sadd.s32 %s194, 1
      %s196 = scalar_select %p193, %s194, %s195
      %p199 = pneg %p193
      %p200 = scmp.eq.s32.totalorder %s42, 3
      %p201 = por %p199, %p200
      %p202 = scmp.ne.s32.totalorder %s194, %s197
      %p203 = scmp.eq.s32.totalorder %s42, 0
      %p204 = por %p202, %p203
      %p205 = scmp.ne.s32.totalorder %s194, %s197
      %p206 = scmp.eq.s32.totalorder %s47, 3
      %p207 = por %p205, %p206
      %p208 = scmp.ne.s32.totalorder %s197, %s198
      %p209 = scmp.eq.s32.totalorder %s47, 0
      %p210 = por %p208, %p209
      %p211 = scmp.ne.s32.totalorder %s197, %s198
      %p212 = scmp.eq.s32.totalorder %s48, 3
      %p213 = por %p211, %p212
      %p215 = scmp.ne.s32.totalorder %s198, %s214
      %p216 = scmp.eq.s32.totalorder %s48, 0
      %p217 = por %p215, %p216
      %s218 = ssub.s32 %s50, %s57
      %p219 = scmp.eq.s32.totalorder %s218, 0
      %s221 = sadd.s32 %s220, 1
      %s222 = scalar_select %p219, %s220, %s221
      %p225 = pneg %p219
      %p226 = scmp.eq.s32.totalorder %s42, 3
      %p227 = por %p225, %p226
      %p228 = scmp.ne.s32.totalorder %s220, %s223
      %p229 = scmp.eq.s32.totalorder %s42, 0
      %p230 = por %p228, %p229
      %p231 = scmp.ne.s32.totalorder %s220, %s223
      %p232 = scmp.eq.s32.totalorder %s47, 3
      %p233 = por %p231, %p232
      %p234 = scmp.ne.s32.totalorder %s223, %s224
      %p235 = scmp.eq.s32.totalorder %s47, 0
      %p236 = por %p234, %p235
      %p237 = scmp.ne.s32.totalorder %s223, %s224
      %p238 = scmp.eq.s32.totalorder %s48, 3
      %p239 = por %p237, %p238
      %p241 = scmp.ne.s32.totalorder %s224, %s240
      %p242 = scmp.eq.s32.totalorder %s48, 0
      %p243 = por %p241, %p242
      %s244 = ssub.s32 %s50, %s57
      %p245 = scmp.eq.s32.totalorder %s244, 0
      %s247 = sadd.s32 %s246, 1
      %s248 = scalar_select %p245, %s246, %s247
      %p251 = pneg %p245
      %p252 = scmp.eq.s32.totalorder %s42, 3
      %p253 = por %p251, %p252
      %p254 = scmp.ne.s32.totalorder %s246, %s249
      %p255 = scmp.eq.s32.totalorder %s42, 0
      %p256 = por %p254, %p255
      %p257 = scmp.ne.s32.totalorder %s246, %s249
      %p258 = scmp.eq.s32.totalorder %s47, 3
      %p259 = por %p257, %p258
      %p260 = scmp.ne.s32.totalorder %s249, %s250
      %p261 = scmp.eq.s32.totalorder %s47, 0
      %p262 = por %p260, %p261
      %p263 = scmp.ne.s32.totalorder %s249, %s250
      %p264 = scmp.eq.s32.totalorder %s48, 3
      %p265 = por %p263, %p264
      %p267 = scmp.ne.s32.totalorder %s250, %s266
      %p268 = scmp.eq.s32.totalorder %s48, 0
      %p269 = por %p267, %p268
      %s270 = ssub.s32 %s50, %s57
      %p271 = scmp.eq.s32.totalorder %s270, 0
      %s273 = sadd.s32 %s272, 1
      %s274 = scalar_select %p271, %s272, %s273
      %p277 = pneg %p271
      %p278 = scmp.eq.s32.totalorder %s42, 3
      %p279 = por %p277, %p278
      %p280 = scmp.ne.s32.totalorder %s272, %s275
      %p281 = scmp.eq.s32.totalorder %s42, 0
      %p282 = por %p280, %p281
      %p283 = scmp.ne.s32.totalorder %s272, %s275
      %p284 = scmp.eq.s32.totalorder %s47, 3
      %p285 = por %p283, %p284
      %p286 = scmp.ne.s32.totalorder %s275, %s276
      %p287 = scmp.eq.s32.totalorder %s47, 0
      %p288 = por %p286, %p287
      %p289 = scmp.ne.s32.totalorder %s275, %s276
      %p290 = scmp.eq.s32.totalorder %s48, 3
      %p291 = por %p289, %p290
      %p293 = scmp.ne.s32.totalorder %s276, %s292
      %p294 = scmp.eq.s32.totalorder %s48, 0
      %p295 = por %p293, %p294
      %s296 = ssub.s32 %s50, %s57
      %p297 = scmp.eq.s32.totalorder %s296, 0
      %s299 = sadd.s32 %s298, 1
      %s300 = scalar_select %p297, %s298, %s299
      %p303 = pneg %p297
      %p304 = scmp.eq.s32.totalorder %s42, 3
      %p305 = por %p303, %p304
      %p306 = scmp.ne.s32.totalorder %s298, %s301
      %p307 = scmp.eq.s32.totalorder %s42, 0
      %p308 = por %p306, %p307
      %p309 = scmp.ne.s32.totalorder %s298, %s301
      %p310 = scmp.eq.s32.totalorder %s47, 3
      %p311 = por %p309, %p310
      %p312 = scmp.ne.s32.totalorder %s301, %s302
      %p313 = scmp.eq.s32.totalorder %s47, 0
      %p314 = por %p312, %p313
      %p315 = scmp.ne.s32.totalorder %s301, %s302
      %p316 = scmp.eq.s32.totalorder %s48, 3
      %p317 = por %p315, %p316
      %p319 = scmp.ne.s32.totalorder %s302, %s318
      %p320 = scmp.eq.s32.totalorder %s48, 0
      %p321 = por %p319, %p320
      %s322 = ssub.s32 %s50, %s57
      %p323 = scmp.eq.s32.totalorder %s322, 0
      %s325 = sadd.s32 %s324, 1
      %s326 = scalar_select %p323, %s324, %s325
      %p329 = pneg %p323
      %p330 = scmp.eq.s32.totalorder %s42, 3
      %p331 = por %p329, %p330
      %p332 = scmp.ne.s32.totalorder %s324, %s327
      %p333 = scmp.eq.s32.totalorder %s42, 0
      %p334 = por %p332, %p333
      %p335 = scmp.ne.s32.totalorder %s324, %s327
      %p336 = scmp.eq.s32.totalorder %s47, 3
      %p337 = por %p335, %p336
      %p338 = scmp.ne.s32.totalorder %s327, %s328
      %p339 = scmp.eq.s32.totalorder %s47, 0
      %p340 = por %p338, %p339
      %p341 = scmp.ne.s32.totalorder %s327, %s328
      %p342 = scmp.eq.s32.totalorder %s48, 3
      %p343 = por %p341, %p342
      %p345 = scmp.ne.s32.totalorder %s328, %s344
      %p346 = scmp.eq.s32.totalorder %s48, 0
      %p347 = por %p345, %p346
      %s348 = ssub.s32 %s50, %s57
      %p349 = scmp.eq.s32.totalorder %s348, 0
      %s351 = sadd.s32 %s350, 1
      %s352 = scalar_select %p349, %s350, %s351
      %p355 = pneg %p349
      %p356 = scmp.eq.s32.totalorder %s42, 3
      %p357 = por %p355, %p356
      %p358 = scmp.ne.s32.totalorder %s350, %s353
      %p359 = scmp.eq.s32.totalorder %s42, 0
      %p360 = por %p358, %p359
      %p361 = scmp.ne.s32.totalorder %s350, %s353
      %p362 = scmp.eq.s32.totalorder %s47, 3
      %p363 = por %p361, %p362
      %p364 = scmp.ne.s32.totalorder %s353, %s354
      %p365 = scmp.eq.s32.totalorder %s47, 0
      %p366 = por %p364, %p365
      %p367 = scmp.ne.s32.totalorder %s353, %s354
      %p368 = scmp.eq.s32.totalorder %s48, 3
      %p369 = por %p367, %p368
      %p371 = scmp.ne.s32.totalorder %s354, %s370
      %p372 = scmp.eq.s32.totalorder %s48, 0
      %p373 = por %p371, %p372
      %s374 = ssub.s32 %s50, %s57
      %p375 = scmp.eq.s32.totalorder %s374, 0
      %s377 = sadd.s32 %s376, 1
      %s378 = scalar_select %p375, %s376, %s377
      %p381 = pneg %p375
      %p382 = scmp.eq.s32.totalorder %s42, 3
      %p383 = por %p381, %p382
      %p384 = scmp.ne.s32.totalorder %s376, %s379
      %p385 = scmp.eq.s32.totalorder %s42, 0
      %p386 = por %p384, %p385
      %p387 = scmp.ne.s32.totalorder %s376, %s379
      %p388 = scmp.eq.s32.totalorder %s47, 3
      %p389 = por %p387, %p388
      %p390 = scmp.ne.s32.totalorder %s379, %s380
      %p391 = scmp.eq.s32.totalorder %s47, 0
      %p392 = por %p390, %p391
      %p393 = scmp.ne.s32.totalorder %s379, %s380
      %p394 = scmp.eq.s32.totalorder %s48, 3
      %p395 = por %p393, %p394
      %p397 = scmp.ne.s32.totalorder %s380, %s396
      %p398 = scmp.eq.s32.totalorder %s48, 0
      %p399 = por %p397, %p398
      %s400 = ssub.s32 %s50, %s57
      %p401 = scmp.eq.s32.totalorder %s400, 0
      %s403 = sadd.s32 %s402, 1
      %s404 = scalar_select %p401, %s402, %s403
      %p407 = pneg %p401
      %p408 = scmp.eq.s32.totalorder %s42, 3
      %p409 = por %p407, %p408
      %p410 = scmp.ne.s32.totalorder %s402, %s405
      %p411 = scmp.eq.s32.totalorder %s42, 0
      %p412 = por %p410, %p411
      %p413 = scmp.ne.s32.totalorder %s402, %s405
      %p414 = scmp.eq.s32.totalorder %s47, 3
      %p415 = por %p413, %p414
      %p416 = scmp.ne.s32.totalorder %s405, %s406
      %p417 = scmp.eq.s32.totalorder %s47, 0
      %p418 = por %p416, %p417
      %p419 = scmp.ne.s32.totalorder %s405, %s406
      %p420 = scmp.eq.s32.totalorder %s48, 3
      %p421 = por %p419, %p420
      %p423 = scmp.ne.s32.totalorder %s406, %s422
      %p424 = scmp.eq.s32.totalorder %s48, 0
      %p425 = por %p423, %p424
      %s426 = ssub.s32 %s50, %s57
      %p427 = scmp.eq.s32.totalorder %s426, 0
      %s429 = sadd.s32 %s428, 1
      %s430 = scalar_select %p427, %s428, %s429
      %p433 = pneg %p427
      %p434 = scmp.eq.s32.totalorder %s42, 3
      %p435 = por %p433, %p434
      %p436 = scmp.ne.s32.totalorder %s428, %s431
      %p437 = scmp.eq.s32.totalorder %s42, 0
      %p438 = por %p436, %p437
      %p439 = scmp.ne.s32.totalorder %s428, %s431
      %p440 = scmp.eq.s32.totalorder %s47, 3
      %p441 = por %p439, %p440
      %p442 = scmp.ne.s32.totalorder %s431, %s432
      %p443 = scmp.eq.s32.totalorder %s47, 0
      %p444 = por %p442, %p443
      %p445 = scmp.ne.s32.totalorder %s431, %s432
      %p446 = scmp.eq.s32.totalorder %s48, 3
      %p447 = por %p445, %p446
      %p449 = scmp.ne.s32.totalorder %s432, %s448
      %p450 = scmp.eq.s32.totalorder %s48, 0
      %p451 = por %p449, %p450
      %s452 = ssub.s32 %s49, %s61
      %p453 = scmp.eq.s32.totalorder %s452, 0
      %s455 = sadd.s32 %s454, 1
      %s456 = scalar_select %p453, %s454, %s455
      %p459 = pneg %p453
      %p460 = scmp.eq.s32.totalorder %s42, 3
      %p461 = por %p459, %p460
      %p462 = scmp.ne.s32.totalorder %s454, %s457
      %p463 = scmp.eq.s32.totalorder %s42, 0
      %p464 = por %p462, %p463
      %p465 = scmp.ne.s32.totalorder %s454, %s457
      %p466 = scmp.eq.s32.totalorder %s47, 3
      %p467 = por %p465, %p466
      %p468 = scmp.ne.s32.totalorder %s457, %s458
      %p469 = scmp.eq.s32.totalorder %s47, 0
      %p470 = por %p468, %p469
      %p471 = scmp.ne.s32.totalorder %s457, %s458
      %p472 = scmp.eq.s32.totalorder %s48, 3
      %p473 = por %p471, %p472
      %p475 = scmp.ne.s32.totalorder %s458, %s474
      %p476 = scmp.eq.s32.totalorder %s48, 0
      %p477 = por %p475, %p476
      %p478 = scmp.le.s32.totalorder 1, %s42
      %p479 = scmp.lt.s32.totalorder %s42, 5
      %p480 = pnand %p478, %p479
      %p481 = pneg %p480
      // Predicated region
      $region9: #{tpu_custom_call.1} parent=5 // pred_check
        _
      $region10: #{tpu_custom_call.1} parent=5 // pred_check_branch
        %483 = sbr.rel (%p480) target = $region12
      $region11: #{tpu_custom_call.1} parent=5 // pred_region
        %s484 = ssub.s32 %s42, 1
      $region12: #{tpu_custom_call.1} parent=5 // pred_fallthru
        _
      %p485 = scmp.lt.s32.totalorder %s42, 4
      // Predicated region
      $region13: #{tpu_custom_call.1} parent=5 // pred_check
        %p486 = pneg %p485
      $region14: #{tpu_custom_call.1} parent=5 // pred_check_branch
        %488 = sbr.rel (%p486) target = $region16
      $region15: #{tpu_custom_call.1} parent=5 // pred_region
        // Predicated region
        $region17: #{tpu_custom_call.1} parent=15 // pred_check
          %p489 = pneg %p74
        $region18: #{tpu_custom_call.1} parent=15 // pred_check_branch
          %491 = sbr.rel (%p489) target = $region20
        $region19: #{tpu_custom_call.1} parent=15 // pred_region
          %s492 = sand.u32 %s64, 1
          %s493 = scalar_lea.sflag [#allocation4], %s492
          %s494 = sand.u32 %s64, 1
          %s495 = smul.addr %s494, 8
          %s496 = scalar_lea.vmem [#allocation3], %s495
          %498 = vsyncadd %s493, 0
          %s499 = smul.addr %s49, 8
          %s500 = scalar_lea.hbm %s0, %s499
          %s502 = sshll.u32 %s500, 4
          %s503 = int_to_ptr.hbm [resolvable:$true] %s502
          %s504 = sshll.u32 %s496, 4
          %s505 = int_to_ptr.vmem [resolvable:$true] %s504
          %507 = dma.hbm_to_vmem [thread:$0]  %s503, 128, %s505, %s493
        $region20: #{tpu_custom_call.1} parent=15 // pred_fallthru
          _
        // Predicated region
        $region21: #{tpu_custom_call.1} parent=15 // pred_check
          %p508 = pneg %p100
        $region22: #{tpu_custom_call.1} parent=15 // pred_check_branch
          %510 = sbr.rel (%p508) target = $region24
        $region23: #{tpu_custom_call.1} parent=15 // pred_region
          %s511 = sand.u32 %s42, 1
          %s512 = scalar_lea.sflag [#allocation7], %s511
          %s513 = sand.u32 %s90, 1
          %s514 = smul.addr %s513, 8
          %s515 = scalar_lea.vmem [#allocation6], %s514
          %517 = vsyncadd %s512, 0
          %s518 = smul.addr %s49, 8
          %s519 = scalar_lea.hbm %s1, %s518
          %s521 = sshll.u32 %s519, 4
          %s522 = int_to_ptr.hbm [resolvable:$true] %s521
          %s523 = sshll.u32 %s515, 4
          %s524 = int_to_ptr.vmem [resolvable:$true] %s523
          %526 = dma.hbm_to_vmem [thread:$0]  %s522, 128, %s524, %s512
        $region24: #{tpu_custom_call.1} parent=15 // pred_fallthru
          _
        // Predicated region
        $region25: #{tpu_custom_call.1} parent=15 // pred_check
          %p527 = pneg %p126
        $region26: #{tpu_custom_call.1} parent=15 // pred_check_branch
          %529 = sbr.rel (%p527) target = $region28
        $region27: #{tpu_custom_call.1} parent=15 // pred_region
          %s530 = sand.u32 %s42, 1
          %s531 = scalar_lea.sflag [#allocation7], %s530
          %s532 = sand.u32 %s116, 1
          %s533 = smul.addr %s532, 8
          %s534 = scalar_lea.vmem [#allocation8], %s533
          %536 = vsyncadd %s531, 0
          %s537 = smul.addr %s49, 8
          %s538 = scalar_lea.hbm %s2, %s537
          %s540 = sshll.u32 %s538, 4
          %s541 = int_to_ptr.hbm [resolvable:$true] %s540
          %s542 = sshll.u32 %s534, 4
          %s543 = int_to_ptr.vmem [resolvable:$true] %s542
          %545 = dma.hbm_to_vmem [thread:$0]  %s541, 128, %s543, %s531
        $region28: #{tpu_custom_call.1} parent=15 // pred_fallthru
          _
        // Predicated region
        $region29: #{tpu_custom_call.1} parent=15 // pred_check
          %p546 = pneg %p152
        $region30: #{tpu_custom_call.1} parent=15 // pred_check_branch
          %548 = sbr.rel (%p546) target = $region32
        $region31: #{tpu_custom_call.1} parent=15 // pred_region
          %s549 = sand.u32 %s42, 1
          %s550 = scalar_lea.sflag [#allocation10], %s549
          %s551 = sand.u32 %s142, 1
          %s552 = scalar_lea.vmem [#allocation9], %s551
          %554 = vsyncadd %s550, 0
          %s555 = scalar_lea.hbm %s3, %s49
          %s557 = sshll.u32 %s555, 4
          %s558 = int_to_ptr.hbm [resolvable:$true] %s557
          %s559 = sshll.u32 %s552, 4
          %s560 = int_to_ptr.vmem [resolvable:$true] %s559
          %562 = dma.hbm_to_vmem [thread:$0]  %s558, 16, %s560, %s550
        $region32: #{tpu_custom_call.1} parent=15 // pred_fallthru
          _
        // Predicated region
        $region33: #{tpu_custom_call.1} parent=15 // pred_check
          %p563 = pneg %p178
        $region34: #{tpu_custom_call.1} parent=15 // pred_check_branch
          %565 = sbr.rel (%p563) target = $region36
        $region35: #{tpu_custom_call.1} parent=15 // pred_region
          %p566 = scmp.lt.s32.totalorder %s50, 1
          %s567 = scalar_select %p566, %s50, 1
          %s568 = smul.addr %s567, 4
          %s569 = smul.addr %s568, 4
          %s570 = scalar_lea.vmem %s4, %s569
        $region36: #{tpu_custom_call.1} parent=15 // pred_fallthru
          _
        // Predicated region
        $region37: #{tpu_custom_call.1} parent=15 // pred_check
          %p571 = pneg %p204
        $region38: #{tpu_custom_call.1} parent=15 // pred_check_branch
          %573 = sbr.rel (%p571) target = $region40
        $region39: #{tpu_custom_call.1} parent=15 // pred_region
          %p574 = scmp.lt.s32.totalorder %s50, 1
          %s575 = scalar_select %p574, %s50, 1
          %s576 = smul.addr %s575, 4
          %s577 = smul.addr %s576, 4
          %s578 = scalar_lea.vmem %s5, %s577
        $region40: #{tpu_custom_call.1} parent=15 // pred_fallthru
          _
        // Predicated region
        $region41: #{tpu_custom_call.1} parent=15 // pred_check
          %p579 = pneg %p230
        $region42: #{tpu_custom_call.1} parent=15 // pred_check_branch
          %581 = sbr.rel (%p579) target = $region44
        $region43: #{tpu_custom_call.1} parent=15 // pred_region
          %p582 = scmp.lt.s32.totalorder %s50, 1
          %s583 = scalar_select %p582, %s50, 1
          %s584 = smul.addr %s583, 4
          %s585 = smul.addr %s584, 4
          %s586 = scalar_lea.vmem %s6, %s585
        $region44: #{tpu_custom_call.1} parent=15 // pred_fallthru
          _
        // Predicated region
        $region45: #{tpu_custom_call.1} parent=15 // pred_check
          %p587 = pneg %p256
        $region46: #{tpu_custom_call.1} parent=15 // pred_check_branch
          %589 = sbr.rel (%p587) target = $region48
        $region47: #{tpu_custom_call.1} parent=15 // pred_region
          %s590 = sand.u32 %s42, 1
          %s591 = scalar_lea.sflag [#allocation10], %s590
          %s592 = sand.u32 %s246, 1
          %s593 = smul.addr %s592, 16
          %s594 = scalar_lea.vmem [#allocation11], %s593
          %596 = vsyncadd %s591, 0
          %s597 = smul.addr %s50, 4
          %s598 = smul.addr %s597, 4
          %s599 = scalar_lea.hbm %s7, %s598
          %s600 = sshll.u32 %s599, 4
          %s601 = int_to_ptr.hbm [resolvable:$true] %s600
          %s602 = sshll.u32 %s594, 4
          %s603 = int_to_ptr.vmem [resolvable:$true] %s602
          %608 = dma.hbm_to_vmem [thread:$0]  %s601, 256, %s603, %s591, 64, 64, 4
        $region48: #{tpu_custom_call.1} parent=15 // pred_fallthru
          _
        // Predicated region
        $region49: #{tpu_custom_call.1} parent=15 // pred_check
          %p609 = pneg %p282
        $region50: #{tpu_custom_call.1} parent=15 // pred_check_branch
          %611 = sbr.rel (%p609) target = $region52
        $region51: #{tpu_custom_call.1} parent=15 // pred_region
          %s612 = sand.u32 %s42, 1
          %s613 = scalar_lea.sflag [#allocation13], %s612
          %s614 = sand.u32 %s272, 1
          %s615 = smul.addr %s614, 16
          %s616 = scalar_lea.vmem [#allocation12], %s615
          %618 = vsyncadd %s613, 0
          %s619 = smul.addr %s50, 4
          %s620 = smul.addr %s619, 4
          %s621 = scalar_lea.hbm %s8, %s620
          %s622 = sshll.u32 %s621, 4
          %s623 = int_to_ptr.hbm [resolvable:$true] %s622
          %s624 = sshll.u32 %s616, 4
          %s625 = int_to_ptr.vmem [resolvable:$true] %s624
          %630 = dma.hbm_to_vmem [thread:$0]  %s623, 256, %s625, %s613, 64, 64, 4
        $region52: #{tpu_custom_call.1} parent=15 // pred_fallthru
          _
        // Predicated region
        $region53: #{tpu_custom_call.1} parent=15 // pred_check
          %p631 = pneg %p308
        $region54: #{tpu_custom_call.1} parent=15 // pred_check_branch
          %633 = sbr.rel (%p631) target = $region56
        $region55: #{tpu_custom_call.1} parent=15 // pred_region
          %s634 = sand.u32 %s42, 1
          %s635 = scalar_lea.sflag [#allocation13], %s634
          %s636 = sand.u32 %s298, 1
          %s637 = smul.addr %s636, 16
          %s638 = scalar_lea.vmem [#allocation14], %s637
          %640 = vsyncadd %s635, 0
          %s641 = smul.addr %s50, 4
          %s642 = smul.addr %s641, 4
          %s643 = scalar_lea.hbm %s9, %s642
          %s644 = sshll.u32 %s643, 4
          %s645 = int_to_ptr.hbm [resolvable:$true] %s644
          %s646 = sshll.u32 %s638, 4
          %s647 = int_to_ptr.vmem [resolvable:$true] %s646
          %652 = dma.hbm_to_vmem [thread:$0]  %s645, 256, %s647, %s635, 64, 64, 4
        $region56: #{tpu_custom_call.1} parent=15 // pred_fallthru
          _
        // Predicated region
        $region57: #{tpu_custom_call.1} parent=15 // pred_check
          %p653 = pneg %p334
        $region58: #{tpu_custom_call.1} parent=15 // pred_check_branch
          %655 = sbr.rel (%p653) target = $region60
        $region59: #{tpu_custom_call.1} parent=15 // pred_region
          %s656 = sand.u32 %s42, 1
          %s657 = scalar_lea.sflag [#allocation16], %s656
          %s658 = sand.u32 %s324, 1
          %s659 = smul.addr %s658, 16
          %s660 = scalar_lea.vmem [#allocation15], %s659
          %662 = vsyncadd %s657, 0
          %s663 = smul.addr %s50, 4
          %s664 = smul.addr %s663, 4
          %s665 = scalar_lea.hbm %s10, %s664
          %s666 = sshll.u32 %s665, 4
          %s667 = int_to_ptr.hbm [resolvable:$true] %s666
          %s668 = sshll.u32 %s660, 4
          %s669 = int_to_ptr.vmem [resolvable:$true] %s668
          %674 = dma.hbm_to_vmem [thread:$0]  %s667, 256, %s669, %s657, 64, 64, 4
        $region60: #{tpu_custom_call.1} parent=15 // pred_fallthru
          _
        // Predicated region
        $region61: #{tpu_custom_call.1} parent=15 // pred_check
          %p675 = pneg %p360
        $region62: #{tpu_custom_call.1} parent=15 // pred_check_branch
          %677 = sbr.rel (%p675) target = $region64
        $region63: #{tpu_custom_call.1} parent=15 // pred_region
          %s678 = sand.u32 %s42, 1
          %s679 = scalar_lea.sflag [#allocation16], %s678
          %s680 = sand.u32 %s350, 1
          %s681 = smul.addr %s680, 16
          %s682 = scalar_lea.vmem [#allocation17], %s681
          %684 = vsyncadd %s679, 0
          %s685 = smul.addr %s50, 4
          %s686 = smul.addr %s685, 4
          %s687 = scalar_lea.hbm %s11, %s686
          %s688 = sshll.u32 %s687, 4
          %s689 = int_to_ptr.hbm [resolvable:$true] %s688
          %s690 = sshll.u32 %s682, 4
          %s691 = int_to_ptr.vmem [resolvable:$true] %s690
          %696 = dma.hbm_to_vmem [thread:$0]  %s689, 256, %s691, %s679, 64, 64, 4
        $region64: #{tpu_custom_call.1} parent=15 // pred_fallthru
          _
        // Predicated region
        $region65: #{tpu_custom_call.1} parent=15 // pred_check
          %p697 = pneg %p386
        $region66: #{tpu_custom_call.1} parent=15 // pred_check_branch
          %699 = sbr.rel (%p697) target = $region68
        $region67: #{tpu_custom_call.1} parent=15 // pred_region
          %s700 = sand.u32 %s42, 1
          %s701 = scalar_lea.sflag [#allocation19], %s700
          %s702 = sand.u32 %s376, 1
          %s703 = smul.addr %s702, 16
          %s704 = scalar_lea.vmem [#allocation18], %s703
          %706 = vsyncadd %s701, 0
          %s707 = smul.addr %s50, 4
          %s708 = smul.addr %s707, 4
          %s709 = scalar_lea.hbm %s12, %s708
          %s710 = sshll.u32 %s709, 4
          %s711 = int_to_ptr.hbm [resolvable:$true] %s710
          %s712 = sshll.u32 %s704, 4
          %s713 = int_to_ptr.vmem [resolvable:$true] %s712
          %718 = dma.hbm_to_vmem [thread:$0]  %s711, 256, %s713, %s701, 64, 64, 4
        $region68: #{tpu_custom_call.1} parent=15 // pred_fallthru
          _
        // Predicated region
        $region69: #{tpu_custom_call.1} parent=15 // pred_check
          %p719 = pneg %p412
        $region70: #{tpu_custom_call.1} parent=15 // pred_check_branch
          %721 = sbr.rel (%p719) target = $region72
        $region71: #{tpu_custom_call.1} parent=15 // pred_region
          %p722 = scmp.lt.s32.totalorder %s50, 1
          %s723 = scalar_select %p722, %s50, 1
          %s724 = smul.addr %s723, 8
          %s725 = smul.addr %s724, 4
          %s726 = scalar_lea.vmem %s13, %s725
        $region72: #{tpu_custom_call.1} parent=15 // pred_fallthru
          _
        // Predicated region
        $region73: #{tpu_custom_call.1} parent=15 // pred_check
          %p727 = pneg %p438
        $region74: #{tpu_custom_call.1} parent=15 // pred_check_branch
          %729 = sbr.rel (%p727) target = $region76
        $region75: #{tpu_custom_call.1} parent=15 // pred_region
          %s730 = sand.u32 %s42, 1
          %s731 = scalar_lea.sflag [#allocation19], %s730
          %s732 = sand.u32 %s428, 1
          %s733 = smul.addr %s732, 16
          %s734 = scalar_lea.vmem [#allocation20], %s733
          %736 = vsyncadd %s731, 0
          %s737 = smul.addr %s50, 2
          %s738 = smul.addr %s737, 8
          %s739 = scalar_lea.hbm %s14, %s738
          %s740 = sshll.u32 %s739, 4
          %s741 = int_to_ptr.hbm [resolvable:$true] %s740
          %s742 = sshll.u32 %s734, 4
          %s743 = int_to_ptr.vmem [resolvable:$true] %s742
          %748 = dma.hbm_to_vmem [thread:$0]  %s741, 256, %s743, %s731, 128, 128, 8
        $region76: #{tpu_custom_call.1} parent=15 // pred_fallthru
          _
      $region16: #{tpu_custom_call.1} parent=5 // pred_fallthru
        _
      %p749 = scmp.le.s32.totalorder 1, %s42
      %p750 = scmp.lt.s32.totalorder %s42, 5
      %p751 = pnand %p749, %p750
      %p752 = pneg %p751
      // Predicated region
      $region77: #{tpu_custom_call.1} parent=5 // pred_check
        _
      $region78: #{tpu_custom_call.1} parent=5 // pred_check_branch
        %754 = sbr.rel (%p751) target = $region80
      $region79: #{tpu_custom_call.1} parent=5 // pred_region
        %s755 = ssub.s32 %s42, 1
        %s756 = sand.u32 %s67, 1
        %s757 = scalar_lea.sflag [#allocation4], %s756
        %s758 = sand.u32 %s67, 1
        %s759 = smul.addr %s758, 8
        %s760 = scalar_lea.vmem [#allocation3], %s759
        // Predicated region
        $region81: #{tpu_custom_call.1} parent=79 // pred_check
          %p761 = pneg %p80
        $region82: #{tpu_custom_call.1} parent=79 // pred_check_branch
          %763 = sbr.rel (%p761) target = $region84
        $region83: #{tpu_custom_call.1} parent=79 // pred_region
          %765 = dma.done %s757, 128
        $region84: #{tpu_custom_call.1} parent=79 // pred_fallthru
          _
        %s766 = sand.u32 %s47, 1
        %s767 = scalar_lea.sflag [#allocation7], %s766
        %s768 = sand.u32 %s93, 1
        %s769 = smul.addr %s768, 8
        %s770 = scalar_lea.vmem [#allocation6], %s769
        // Predicated region
        $region85: #{tpu_custom_call.1} parent=79 // pred_check
          %p771 = pneg %p106
        $region86: #{tpu_custom_call.1} parent=79 // pred_check_branch
          %773 = sbr.rel (%p771) target = $region88
        $region87: #{tpu_custom_call.1} parent=79 // pred_region
          %775 = dma.done %s767, 128
        $region88: #{tpu_custom_call.1} parent=79 // pred_fallthru
          _
        %s776 = sand.u32 %s47, 1
        %s777 = scalar_lea.sflag [#allocation7], %s776
        %s778 = sand.u32 %s119, 1
        %s779 = smul.addr %s778, 8
        %s780 = scalar_lea.vmem [#allocation8], %s779
        // Predicated region
        $region89: #{tpu_custom_call.1} parent=79 // pred_check
          %p781 = pneg %p132
        $region90: #{tpu_custom_call.1} parent=79 // pred_check_branch
          %783 = sbr.rel (%p781) target = $region92
        $region91: #{tpu_custom_call.1} parent=79 // pred_region
          %785 = dma.done %s777, 128
        $region92: #{tpu_custom_call.1} parent=79 // pred_fallthru
          _
        %s786 = sand.u32 %s47, 1
        %s787 = scalar_lea.sflag [#allocation10], %s786
        %s788 = sand.u32 %s145, 1
        %s789 = scalar_lea.vmem [#allocation9], %s788
        // Predicated region
        $region93: #{tpu_custom_call.1} parent=79 // pred_check
          %p790 = pneg %p158
        $region94: #{tpu_custom_call.1} parent=79 // pred_check_branch
          %792 = sbr.rel (%p790) target = $region96
        $region95: #{tpu_custom_call.1} parent=79 // pred_region
          %794 = dma.done %s787, 16
        $region96: #{tpu_custom_call.1} parent=79 // pred_fallthru
          _
        %s795 = sand.u32 %s47, 1
        %s796 = scalar_lea.sflag [#allocation10], %s795
        %s797 = sand.u32 %s249, 1
        %s798 = smul.addr %s797, 16
        %s799 = scalar_lea.vmem [#allocation11], %s798
        // Predicated region
        $region97: #{tpu_custom_call.1} parent=79 // pred_check
          %p800 = pneg %p262
        $region98: #{tpu_custom_call.1} parent=79 // pred_check_branch
          %802 = sbr.rel (%p800) target = $region100
        $region99: #{tpu_custom_call.1} parent=79 // pred_region
          %804 = dma.done %s796, 256
        $region100: #{tpu_custom_call.1} parent=79 // pred_fallthru
          _
        %s805 = sand.u32 %s47, 1
        %s806 = scalar_lea.sflag [#allocation13], %s805
        %s807 = sand.u32 %s275, 1
        %s808 = smul.addr %s807, 16
        %s809 = scalar_lea.vmem [#allocation12], %s808
        // Predicated region
        $region101: #{tpu_custom_call.1} parent=79 // pred_check
          %p810 = pneg %p288
        $region102: #{tpu_custom_call.1} parent=79 // pred_check_branch
          %812 = sbr.rel (%p810) target = $region104
        $region103: #{tpu_custom_call.1} parent=79 // pred_region
          %814 = dma.done %s806, 256
        $region104: #{tpu_custom_call.1} parent=79 // pred_fallthru
          _
        %s815 = sand.u32 %s47, 1
        %s816 = scalar_lea.sflag [#allocation13], %s815
        %s817 = sand.u32 %s301, 1
        %s818 = smul.addr %s817, 16
        %s819 = scalar_lea.vmem [#allocation14], %s818
        // Predicated region
        $region105: #{tpu_custom_call.1} parent=79 // pred_check
          %p820 = pneg %p314
        $region106: #{tpu_custom_call.1} parent=79 // pred_check_branch
          %822 = sbr.rel (%p820) target = $region108
        $region107: #{tpu_custom_call.1} parent=79 // pred_region
          %824 = dma.done %s816, 256
        $region108: #{tpu_custom_call.1} parent=79 // pred_fallthru
          _
        %s825 = sand.u32 %s47, 1
        %s826 = scalar_lea.sflag [#allocation16], %s825
        %s827 = sand.u32 %s327, 1
        %s828 = smul.addr %s827, 16
        %s829 = scalar_lea.vmem [#allocation15], %s828
        // Predicated region
        $region109: #{tpu_custom_call.1} parent=79 // pred_check
          %p830 = pneg %p340
        $region110: #{tpu_custom_call.1} parent=79 // pred_check_branch
          %832 = sbr.rel (%p830) target = $region112
        $region111: #{tpu_custom_call.1} parent=79 // pred_region
          %834 = dma.done %s826, 256
        $region112: #{tpu_custom_call.1} parent=79 // pred_fallthru
          _
        %s835 = sand.u32 %s47, 1
        %s836 = scalar_lea.sflag [#allocation16], %s835
        %s837 = sand.u32 %s353, 1
        %s838 = smul.addr %s837, 16
        %s839 = scalar_lea.vmem [#allocation17], %s838
        // Predicated region
        $region113: #{tpu_custom_call.1} parent=79 // pred_check
          %p840 = pneg %p366
        $region114: #{tpu_custom_call.1} parent=79 // pred_check_branch
          %842 = sbr.rel (%p840) target = $region116
        $region115: #{tpu_custom_call.1} parent=79 // pred_region
          %844 = dma.done %s836, 256
        $region116: #{tpu_custom_call.1} parent=79 // pred_fallthru
          _
        %s845 = sand.u32 %s47, 1
        %s846 = scalar_lea.sflag [#allocation19], %s845
        %s847 = sand.u32 %s379, 1
        %s848 = smul.addr %s847, 16
        %s849 = scalar_lea.vmem [#allocation18], %s848
        // Predicated region
        $region117: #{tpu_custom_call.1} parent=79 // pred_check
          %p850 = pneg %p392
        $region118: #{tpu_custom_call.1} parent=79 // pred_check_branch
          %852 = sbr.rel (%p850) target = $region120
        $region119: #{tpu_custom_call.1} parent=79 // pred_region
          %854 = dma.done %s846, 256
        $region120: #{tpu_custom_call.1} parent=79 // pred_fallthru
          _
        %s855 = sand.u32 %s47, 1
        %s856 = scalar_lea.sflag [#allocation19], %s855
        %s857 = sand.u32 %s431, 1
        %s858 = smul.addr %s857, 16
        %s859 = scalar_lea.vmem [#allocation20], %s858
        // Predicated region
        $region121: #{tpu_custom_call.1} parent=79 // pred_check
          %p860 = pneg %p444
        $region122: #{tpu_custom_call.1} parent=79 // pred_check_branch
          %862 = sbr.rel (%p860) target = $region124
        $region123: #{tpu_custom_call.1} parent=79 // pred_region
          %864 = dma.done %s856, 256
        $region124: #{tpu_custom_call.1} parent=79 // pred_fallthru
          _
        %s865 = sand.u32 %s67, 1
        %s866 = scalar_lea.sflag [#allocation4], %s865
        %s867 = sand.u32 %s67, 1
        %s868 = smul.addr %s867, 8
        %s869 = scalar_lea.vmem [#allocation3], %s868
        %p870 = pneg %p80
        %p871 = pneg %p77
        %s872 = sand.u32 %s47, 1
        %s873 = scalar_lea.sflag [#allocation7], %s872
        %s874 = sand.u32 %s93, 1
        %s875 = smul.addr %s874, 8
        %s876 = scalar_lea.vmem [#allocation6], %s875
        %p877 = pneg %p106
        %p878 = pneg %p103
        %s879 = sand.u32 %s47, 1
        %s880 = scalar_lea.sflag [#allocation7], %s879
        %s881 = sand.u32 %s119, 1
        %s882 = smul.addr %s881, 8
        %s883 = scalar_lea.vmem [#allocation8], %s882
        %p884 = pneg %p132
        %p885 = pneg %p129
        %s886 = sand.u32 %s47, 1
        %s887 = scalar_lea.sflag [#allocation10], %s886
        %s888 = sand.u32 %s145, 1
        %s889 = scalar_lea.vmem [#allocation9], %s888
        %p890 = pneg %p158
        %p891 = pneg %p155
        %p892 = scmp.lt.s32.totalorder %s52, 1
        %s893 = scalar_select %p892, %s52, 1
        %s894 = smul.addr %s893, 4
        %s895 = smul.addr %s894, 4
        %s896 = scalar_lea.vmem %s4, %s895
        %p897 = pneg %p184
        %p898 = pneg %p181
        %p899 = scmp.lt.s32.totalorder %s52, 1
        %s900 = scalar_select %p899, %s52, 1
        %s901 = smul.addr %s900, 4
        %s902 = smul.addr %s901, 4
        %s903 = scalar_lea.vmem %s5, %s902
        %p904 = pneg %p210
        %p905 = pneg %p207
        %p906 = scmp.lt.s32.totalorder %s52, 1
        %s907 = scalar_select %p906, %s52, 1
        %s908 = smul.addr %s907, 4
        %s909 = smul.addr %s908, 4
        %s910 = scalar_lea.vmem %s6, %s909
        %p911 = pneg %p236
        %p912 = pneg %p233
        %s913 = sand.u32 %s47, 1
        %s914 = scalar_lea.sflag [#allocation10], %s913
        %s915 = sand.u32 %s249, 1
        %s916 = smul.addr %s915, 16
        %s917 = scalar_lea.vmem [#allocation11], %s916
        %p918 = pneg %p262
        %p919 = pneg %p259
        %s920 = sand.u32 %s47, 1
        %s921 = scalar_lea.sflag [#allocation13], %s920
        %s922 = sand.u32 %s275, 1
        %s923 = smul.addr %s922, 16
        %s924 = scalar_lea.vmem [#allocation12], %s923
        %p925 = pneg %p288
        %p926 = pneg %p285
        %s927 = sand.u32 %s47, 1
        %s928 = scalar_lea.sflag [#allocation13], %s927
        %s929 = sand.u32 %s301, 1
        %s930 = smul.addr %s929, 16
        %s931 = scalar_lea.vmem [#allocation14], %s930
        %p932 = pneg %p314
        %p933 = pneg %p311
        %s934 = sand.u32 %s47, 1
        %s935 = scalar_lea.sflag [#allocation16], %s934
        %s936 = sand.u32 %s327, 1
        %s937 = smul.addr %s936, 16
        %s938 = scalar_lea.vmem [#allocation15], %s937
        %p939 = pneg %p340
        %p940 = pneg %p337
        %s941 = sand.u32 %s47, 1
        %s942 = scalar_lea.sflag [#allocation16], %s941
        %s943 = sand.u32 %s353, 1
        %s944 = smul.addr %s943, 16
        %s945 = scalar_lea.vmem [#allocation17], %s944
        %p946 = pneg %p366
        %p947 = pneg %p363
        %s948 = sand.u32 %s47, 1
        %s949 = scalar_lea.sflag [#allocation19], %s948
        %s950 = sand.u32 %s379, 1
        %s951 = smul.addr %s950, 16
        %s952 = scalar_lea.vmem [#allocation18], %s951
        %p953 = pneg %p392
        %p954 = pneg %p389
        %p955 = scmp.lt.s32.totalorder %s52, 1
        %s956 = scalar_select %p955, %s52, 1
        %s957 = smul.addr %s956, 8
        %s958 = smul.addr %s957, 4
        %s959 = scalar_lea.vmem %s13, %s958
        %p960 = pneg %p418
        %p961 = pneg %p415
        %s962 = sand.u32 %s47, 1
        %s963 = scalar_lea.sflag [#allocation19], %s962
        %s964 = sand.u32 %s431, 1
        %s965 = smul.addr %s964, 16
        %s966 = scalar_lea.vmem [#allocation20], %s965
        %p967 = pneg %p444
        %p968 = pneg %p441
        %p969 = pneg %p470
        %p970 = pneg %p467
        %s971 = sand.u32 %s457, 1
        %s972 = scalar_lea.sflag [#allocation5], %s971
        %s973 = sand.u32 %s457, 1
        %s974 = smul.addr %s973, 8
        %s975 = scalar_lea.vmem [#allocation21], %s974
        %p976 = scmp.lt.s32.totalorder %s52, 1
        %s977 = scalar_select %p976, %s52, 1
        %s978 = smul.addr %s977, 4
        %s979 = smul.addr %s978, 4
        %s980 = scalar_lea.vmem %s4, %s979
        %p981 = scmp.lt.s32.totalorder %s52, 1
        %s982 = scalar_select %p981, %s52, 1
        %s983 = smul.addr %s982, 4
        %s984 = smul.addr %s983, 4
        %s985 = scalar_lea.vmem %s5, %s984
        %p986 = scmp.lt.s32.totalorder %s52, 1
        %s987 = scalar_select %p986, %s52, 1
        %s988 = smul.addr %s987, 4
        %s989 = smul.addr %s988, 4
        %s990 = scalar_lea.vmem %s6, %s989
        %p991 = scmp.lt.s32.totalorder %s52, 1
        %s992 = scalar_select %p991, %s52, 1
        %s993 = smul.addr %s992, 8
        %s994 = smul.addr %s993, 4
        %s995 = scalar_lea.vmem %s13, %s994
        %p997 = scmp.eq.s32.totalorder %s52, 0
        // Predicated region
        $region125: #{tpu_custom_call.1} parent=79 // pred_check
          %p998 = pneg %p997
        $region126: #{tpu_custom_call.1} parent=79 // pred_check_branch
          %1000 = sbr.rel (%p998) target = $region128
        $region127: #{tpu_custom_call.1} parent=79 // pred_region
          %v1001 = vld [vmem:[%s760] sm:$0xff]
          %vm1002 = vcmask 261120
          %1003 = vst.msk [vmem:[#allocation2] sm:$0xff] %vm1002, %v1001
        $region128: #{tpu_custom_call.1} parent=79 // pred_fallthru
          _
        %v1004 = vld [vmem:[#allocation2] sm:$0xff]
        %v1005 = vpack.c.bf16 %v1004, %v1004
        %v1006 = vld [vmem:[%s770] sm:$0xff]
        %v1007 = vpack.c.bf16 %v1006, %v1006
        %v1008 = vld [vmem:[%s859] sm:$0xff]
        %v1009 = vld [vmem:[%s859 + $0x8] sm:$0xff]
        %v1010 = vld [vmem:[%s780] sm:$0xff]
        %v1011 = vld [vmem:[%s789] sm:$0x1]
        %v1012 = vld [vmem:[%s980] sm:$0xf]
        %v1013 = vld [vmem:[%s980 + $0x4] sm:$0xf]
        %v1014 = vld [vmem:[%s980 + $0x8] sm:$0xf]
        %v1015 = vld [vmem:[%s980 + $0xc] sm:$0xf]
        %v1016 = vld [vmem:[%s985] sm:$0xf]
        %v1017 = vld [vmem:[%s985 + $0x4] sm:$0xf]
        %v1018 = vld [vmem:[%s985 + $0x8] sm:$0xf]
        %v1019 = vld [vmem:[%s985 + $0xc] sm:$0xf]
        %v1020 = vld [vmem:[%s990] sm:$0xf]
        %v1021 = vld [vmem:[%s990 + $0x4] sm:$0xf]
        %v1022 = vld [vmem:[%s990 + $0x8] sm:$0xf]
        %v1023 = vld [vmem:[%s990 + $0xc] sm:$0xf]
        %v1024 = vld [vmem:[%s799] sm:$0xf]
        %v1025 = vld [vmem:[%s799 + $0x4] sm:$0xf]
        %v1026 = vld [vmem:[%s799 + $0x8] sm:$0xf]
        %v1027 = vld [vmem:[%s799 + $0xc] sm:$0xf]
        %v1028 = vperm.slane %v1008, 0
        %v1033 = vunpack.c.l.b16 %v1012
        %v1034 = vunpack.c.l.b16 %v1013
        %v1035 = vunpack.c.l.b16 %v1014
        %v1036 = vunpack.c.l.b16 %v1015
        %v1037 = vpack.c.b16 %v1034, %v1033
        %v1038 = vpack.c.b16 %v1036, %v1035
        %vm1041 = vcmask 261120
        %v1043 = vsel %vm1041, %v1005, 0
        %1045 = vmatpush.bf16.msra.mxu0 0
        %1046 = vmatpush.bf16.msra.mxu0 0
        %1047 = vmatpush.bf16.msra.mxu0 0
        %1048 = vmatpush.bf16.msra.mxu0 0
        %1049 = vmatpush.bf16.msra.mxu0 0
        %1050 = vmatpush.bf16.msra.mxu0 0
        %1051 = vmatpush.bf16.msra.mxu0 %v1038
        %1052 = vmatpush.bf16.msra.mxu0 %v1037
        %1053 = vmatmul.bf16.gmra.mxu0 %v1043
        %v1054 = vpop.f32.mrf.mxu0
        %v1055 = vadd.f32 %v1028, %v1054
        %v1056 = vpop.f32.mrf.mxu0
        %1057 = vdwg.mxu0
        %v1058 = vperm.slane %v1008, 1
        %v1063 = vunpack.c.l.b16 %v1016
        %v1064 = vunpack.c.l.b16 %v1017
        %v1065 = vunpack.c.l.b16 %v1018
        %v1066 = vunpack.c.l.b16 %v1019
        %v1067 = vpack.c.b16 %v1064, %v1063
        %v1068 = vpack.c.b16 %v1066, %v1065
        %1071 = vmatpush.bf16.msra.mxu0 0
        %1072 = vmatpush.bf16.msra.mxu0 0
        %1073 = vmatpush.bf16.msra.mxu0 0
        %1074 = vmatpush.bf16.msra.mxu0 0
        %1075 = vmatpush.bf16.msra.mxu0 0
        %1076 = vmatpush.bf16.msra.mxu0 0
        %1077 = vmatpush.bf16.msra.mxu0 %v1068
        %1078 = vmatpush.bf16.msra.mxu0 %v1067
        %1079 = vmatmul.bf16.gmra.mxu0 %v1043
        %v1080 = vpop.f32.mrf.mxu0
        %v1081 = vadd.f32 %v1058, %v1080
        %v1082 = vpop.f32.mrf.mxu0
        %1083 = vdwg.mxu0
        %v1084 = vperm.slane %v1008, 2
        %v1089 = vunpack.c.l.b16 %v1020
        %v1090 = vunpack.c.l.b16 %v1021
        %v1091 = vunpack.c.l.b16 %v1022
        %v1092 = vunpack.c.l.b16 %v1023
        %v1093 = vpack.c.b16 %v1090, %v1089
        %v1094 = vpack.c.b16 %v1092, %v1091
        %1097 = vmatpush.bf16.msra.mxu0 0
        %1098 = vmatpush.bf16.msra.mxu0 0
        %1099 = vmatpush.bf16.msra.mxu0 0
        %1100 = vmatpush.bf16.msra.mxu0 0
        %1101 = vmatpush.bf16.msra.mxu0 0
        %1102 = vmatpush.bf16.msra.mxu0 0
        %1103 = vmatpush.bf16.msra.mxu0 %v1094
        %1104 = vmatpush.bf16.msra.mxu0 %v1093
        %1105 = vmatmul.bf16.gmra.mxu0 %v1043
        %v1106 = vpop.f32.mrf.mxu0
        %v1107 = vadd.f32 %v1084, %v1106
        %v1108 = vpop.f32.mrf.mxu0
        %1109 = vdwg.mxu0
        %1111 = vrot.lane.b32.xlu0 %v1055, 112
        %v1112 = vpop.permute.xlu0 %1111
        %v1114 = vrot.slane %v1055, 4
        %vm1115 = vcmask 1047556
        %v1116 = vsel %vm1115, 0.0, %v1114
        %v1118 = vunpack.c.l.s4 1983009808
        %v1119 = vunpack.c.0.s8 %v1118
        %v1120 = vperm.slane %v1055, %v1119
        %v1122 = vunpack.c.l.s4 1983009808
        %v1123 = vunpack.c.0.s8 %v1122
        %v1124 = vperm.slane %v1116, %v1123
        %v1125 = vrot.slane %v1112, 4
        %v1126 = vsel %vm1115, 0.0, %v1125
        %v1128 = vunpack.c.l.s4 1983009808
        %v1129 = vunpack.c.0.s8 %v1128
        %v1130 = vperm.slane %v1112, %v1129
        %v1132 = vunpack.c.l.s4 1983009808
        %v1133 = vunpack.c.0.s8 %v1132
        %v1134 = vperm.slane %v1126, %v1133
        %v1135 = vrot.slane %v1130, 4
        %v1136 = vsel %vm1115, %v1135, %v1120
        %v1137 = vrot.slane %v1120, 4
        %v1138 = vsel %vm1115, %v1130, %v1137
        %v1140 = vunpack.c.l.s4 1934713408
        %v1141 = vunpack.c.0.s8 %v1140
        %v1142 = vperm.slane %v1136, %v1141
        %v1144 = vunpack.c.l.s4 1934713408
        %v1145 = vunpack.c.0.s8 %v1144
        %v1146 = vperm.slane %v1138, %v1145
        %v1147 = vrot.slane %v1134, 4
        %v1148 = vsel %vm1115, %v1147, %v1124
        %v1149 = vrot.slane %v1124, 4
        %v1150 = vsel %vm1115, %v1134, %v1149
        %v1152 = vunpack.c.l.s4 1934713408
        %v1153 = vunpack.c.0.s8 %v1152
        %v1154 = vperm.slane %v1148, %v1153
        %v1156 = vunpack.c.l.s4 1934713408
        %v1157 = vunpack.c.0.s8 %v1156
        %v1158 = vperm.slane %v1150, %v1157
        %v1159 = vrot.slane %v1142, 4
        %v1160 = vsel %vm1115, 0.0, %v1159
        %v1161 = vrot.slane %v1146, 4
        %v1162 = vsel %vm1115, 0.0, %v1161
        %v1163 = vrot.slane %v1154, 4
        %v1164 = vsel %vm1115, 0.0, %v1163
        %v1165 = vrot.slane %v1158, 4
        %v1166 = vsel %vm1115, 0.0, %v1165
        %v1167 = vsel %vm1115, %v1161, %v1142
        %v1169 = vunpack.c.l.s4 1983009808
        %v1170 = vunpack.c.0.s8 %v1169
        %v1171 = vperm.slane %v1167, %v1170
        %v1172 = vrot.slane %v1162, 4
        %v1173 = vsel %vm1115, %v1172, %v1160
        %v1175 = vunpack.c.l.s4 1983009808
        %v1176 = vunpack.c.0.s8 %v1175
        %v1177 = vperm.slane %v1173, %v1176
        %v1178 = vsel %vm1115, %v1165, %v1154
        %v1180 = vunpack.c.l.s4 1983009808
        %v1181 = vunpack.c.0.s8 %v1180
        %v1182 = vperm.slane %v1178, %v1181
        %v1183 = vrot.slane %v1166, 4
        %v1184 = vsel %vm1115, %v1183, %v1164
        %v1186 = vunpack.c.l.s4 1983009808
        %v1187 = vunpack.c.0.s8 %v1186
        %v1188 = vperm.slane %v1184, %v1187
        %v1189 = vrot.slane %v1177, 4
        %v1190 = vsel %vm1115, %v1189, %v1171
        %v1192 = vunpack.c.l.s4 1934713408
        %v1193 = vunpack.c.0.s8 %v1192
        %v1194 = vperm.slane %v1190, %v1193
        %v1195 = vrot.slane %v1188, 4
        %v1196 = vsel %vm1115, %v1195, %v1182
        %v1198 = vunpack.c.l.s4 1934713408
        %v1199 = vunpack.c.0.s8 %v1198
        %v1200 = vperm.slane %v1196, %v1199
        %v1201 = vrot.slane %v1200, 4
        %v1202 = vsel %vm1115, %v1201, %v1194
        %v1203 = vrot.slane %v1194, 4
        %v1204 = vsel %vm1115, %v1200, %v1203
        %v1205 = vpack.c.bf16 %v1202, %v1202
        %v1206 = vpack.c.bf16 %v1204, %v1204
        %1208 = vrot.lane.b32.xlu0 %v1081, 112
        %v1209 = vpop.permute.xlu0 %1208
        %v1211 = vrot.slane %v1081, 4
        %v1212 = vsel %vm1115, 0.0, %v1211
        %v1214 = vunpack.c.l.s4 1983009808
        %v1215 = vunpack.c.0.s8 %v1214
        %v1216 = vperm.slane %v1081, %v1215
        %v1218 = vunpack.c.l.s4 1983009808
        %v1219 = vunpack.c.0.s8 %v1218
        %v1220 = vperm.slane %v1212, %v1219
        %v1221 = vrot.slane %v1209, 4
        %v1222 = vsel %vm1115, 0.0, %v1221
        %v1224 = vunpack.c.l.s4 1983009808
        %v1225 = vunpack.c.0.s8 %v1224
        %v1226 = vperm.slane %v1209, %v1225
        %v1228 = vunpack.c.l.s4 1983009808
        %v1229 = vunpack.c.0.s8 %v1228
        %v1230 = vperm.slane %v1222, %v1229
        %v1231 = vrot.slane %v1226, 4
        %v1232 = vsel %vm1115, %v1231, %v1216
        %v1233 = vrot.slane %v1216, 4
        %v1234 = vsel %vm1115, %v1226, %v1233
        %v1236 = vunpack.c.l.s4 1934713408
        %v1237 = vunpack.c.0.s8 %v1236
        %v1238 = vperm.slane %v1232, %v1237
        %v1240 = vunpack.c.l.s4 1934713408
        %v1241 = vunpack.c.0.s8 %v1240
        %v1242 = vperm.slane %v1234, %v1241
        %v1243 = vrot.slane %v1230, 4
        %v1244 = vsel %vm1115, %v1243, %v1220
        %v1245 = vrot.slane %v1220, 4
        %v1246 = vsel %vm1115, %v1230, %v1245
        %v1248 = vunpack.c.l.s4 1934713408
        %v1249 = vunpack.c.0.s8 %v1248
        %v1250 = vperm.slane %v1244, %v1249
        %v1252 = vunpack.c.l.s4 1934713408
        %v1253 = vunpack.c.0.s8 %v1252
        %v1254 = vperm.slane %v1246, %v1253
        %v1255 = vrot.slane %v1238, 4
        %v1256 = vsel %vm1115, 0.0, %v1255
        %v1257 = vrot.slane %v1242, 4
        %v1258 = vsel %vm1115, 0.0, %v1257
        %v1259 = vrot.slane %v1250, 4
        %v1260 = vsel %vm1115, 0.0, %v1259
        %v1261 = vrot.slane %v1254, 4
        %v1262 = vsel %vm1115, 0.0, %v1261
        %v1263 = vsel %vm1115, %v1257, %v1238
        %v1265 = vunpack.c.l.s4 1983009808
        %v1266 = vunpack.c.0.s8 %v1265
        %v1267 = vperm.slane %v1263, %v1266
        %v1268 = vrot.slane %v1258, 4
        %v1269 = vsel %vm1115, %v1268, %v1256
        %v1271 = vunpack.c.l.s4 1983009808
        %v1272 = vunpack.c.0.s8 %v1271
        %v1273 = vperm.slane %v1269, %v1272
        %v1274 = vsel %vm1115, %v1261, %v1250
        %v1276 = vunpack.c.l.s4 1983009808
        %v1277 = vunpack.c.0.s8 %v1276
        %v1278 = vperm.slane %v1274, %v1277
        %v1279 = vrot.slane %v1262, 4
        %v1280 = vsel %vm1115, %v1279, %v1260
        %v1282 = vunpack.c.l.s4 1983009808
        %v1283 = vunpack.c.0.s8 %v1282
        %v1284 = vperm.slane %v1280, %v1283
        %v1285 = vrot.slane %v1273, 4
        %v1286 = vsel %vm1115, %v1285, %v1267
        %v1288 = vunpack.c.l.s4 1934713408
        %v1289 = vunpack.c.0.s8 %v1288
        %v1290 = vperm.slane %v1286, %v1289
        %v1291 = vrot.slane %v1284, 4
        %v1292 = vsel %vm1115, %v1291, %v1278
        %v1294 = vunpack.c.l.s4 1934713408
        %v1295 = vunpack.c.0.s8 %v1294
        %v1296 = vperm.slane %v1292, %v1295
        %v1297 = vrot.slane %v1296, 4
        %v1298 = vsel %vm1115, %v1297, %v1290
        %v1299 = vrot.slane %v1290, 4
        %v1300 = vsel %vm1115, %v1296, %v1299
        %v1301 = vpack.c.bf16 %v1298, %v1298
        %v1302 = vpack.c.bf16 %v1300, %v1300
        %1304 = vrot.lane.b32.xlu0 %v1107, 112
        %v1305 = vpop.permute.xlu0 %1304
        %v1307 = vrot.slane %v1107, 4
        %v1308 = vsel %vm1115, 0.0, %v1307
        %v1310 = vunpack.c.l.s4 1983009808
        %v1311 = vunpack.c.0.s8 %v1310
        %v1312 = vperm.slane %v1107, %v1311
        %v1314 = vunpack.c.l.s4 1983009808
        %v1315 = vunpack.c.0.s8 %v1314
        %v1316 = vperm.slane %v1308, %v1315
        %v1317 = vrot.slane %v1305, 4
        %v1318 = vsel %vm1115, 0.0, %v1317
        %v1320 = vunpack.c.l.s4 1983009808
        %v1321 = vunpack.c.0.s8 %v1320
        %v1322 = vperm.slane %v1305, %v1321
        %v1324 = vunpack.c.l.s4 1983009808
        %v1325 = vunpack.c.0.s8 %v1324
        %v1326 = vperm.slane %v1318, %v1325
        %v1327 = vrot.slane %v1322, 4
        %v1328 = vsel %vm1115, %v1327, %v1312
        %v1329 = vrot.slane %v1312, 4
        %v1330 = vsel %vm1115, %v1322, %v1329
        %v1332 = vunpack.c.l.s4 1934713408
        %v1333 = vunpack.c.0.s8 %v1332
        %v1334 = vperm.slane %v1328, %v1333
        %v1336 = vunpack.c.l.s4 1934713408
        %v1337 = vunpack.c.0.s8 %v1336
        %v1338 = vperm.slane %v1330, %v1337
        %v1339 = vrot.slane %v1326, 4
        %v1340 = vsel %vm1115, %v1339, %v1316
        %v1341 = vrot.slane %v1316, 4
        %v1342 = vsel %vm1115, %v1326, %v1341
        %v1344 = vunpack.c.l.s4 1934713408
        %v1345 = vunpack.c.0.s8 %v1344
        %v1346 = vperm.slane %v1340, %v1345
        %v1348 = vunpack.c.l.s4 1934713408
        %v1349 = vunpack.c.0.s8 %v1348
        %v1350 = vperm.slane %v1342, %v1349
        %v1351 = vrot.slane %v1334, 4
        %v1352 = vsel %vm1115, 0.0, %v1351
        %v1353 = vrot.slane %v1338, 4
        %v1354 = vsel %vm1115, 0.0, %v1353
        %v1355 = vrot.slane %v1346, 4
        %v1356 = vsel %vm1115, 0.0, %v1355
        %v1357 = vrot.slane %v1350, 4
        %v1358 = vsel %vm1115, 0.0, %v1357
        %v1359 = vsel %vm1115, %v1353, %v1334
        %v1361 = vunpack.c.l.s4 1983009808
        %v1362 = vunpack.c.0.s8 %v1361
        %v1363 = vperm.slane %v1359, %v1362
        %v1364 = vrot.slane %v1354, 4
        %v1365 = vsel %vm1115, %v1364, %v1352
        %v1367 = vunpack.c.l.s4 1983009808
        %v1368 = vunpack.c.0.s8 %v1367
        %v1369 = vperm.slane %v1365, %v1368
        %v1370 = vsel %vm1115, %v1357, %v1346
        %v1372 = vunpack.c.l.s4 1983009808
        %v1373 = vunpack.c.0.s8 %v1372
        %v1374 = vperm.slane %v1370, %v1373
        %v1375 = vrot.slane %v1358, 4
        %v1376 = vsel %vm1115, %v1375, %v1356
        %v1378 = vunpack.c.l.s4 1983009808
        %v1379 = vunpack.c.0.s8 %v1378
        %v1380 = vperm.slane %v1376, %v1379
        %v1381 = vrot.slane %v1369, 4
        %v1382 = vsel %vm1115, %v1381, %v1363
        %v1384 = vunpack.c.l.s4 1934713408
        %v1385 = vunpack.c.0.s8 %v1384
        %v1386 = vperm.slane %v1382, %v1385
        %v1387 = vrot.slane %v1380, 4
        %v1388 = vsel %vm1115, %v1387, %v1374
        %v1390 = vunpack.c.l.s4 1934713408
        %v1391 = vunpack.c.0.s8 %v1390
        %v1392 = vperm.slane %v1388, %v1391
        %v1393 = vrot.slane %v1392, 4
        %v1394 = vsel %vm1115, %v1393, %v1386
        %v1395 = vrot.slane %v1386, 4
        %v1396 = vsel %vm1115, %v1392, %v1395
        %v1397 = vpack.c.bf16 %v1394, %v1394
        %v1398 = vpack.c.bf16 %v1396, %v1396
        %vm1399 = vcmask 130048
        %v1401 = vsel %vm1399, %v1205, 0
        %v1404 = vsel %vm1399, %v1301, 0
        %1406 = vmatpush.bf16.xpose.msra.mxu0 0
        %1407 = vmatpush.bf16.xpose.msra.mxu0 0
        %1408 = vmatpush.bf16.xpose.msra.mxu0 0
        %1409 = vmatpush.bf16.xpose.msra.mxu0 0
        %1410 = vmatpush.bf16.xpose.msra.mxu0 0
        %1411 = vmatpush.bf16.xpose.msra.mxu0 0
        %1412 = vmatpush.bf16.xpose.msra.mxu0 0
        %1413 = vmatpush.bf16.xpose.msra.mxu0 %v1404
        %1414 = vmatmul.bf16.gmra.mxu0 %v1401
        %v1415 = vpop.f32.mrf.mxu0
        %v1416 = vadd.f32 0.0, %v1415
        %v1417 = vpop.f32.mrf.mxu0
        %1418 = vdwg.mxu0
        %v1420 = vsel %vm1399, %v1206, 0
        %v1423 = vsel %vm1399, %v1302, 0
        %1425 = vmatpush.bf16.xpose.msra.mxu0 0
        %1426 = vmatpush.bf16.xpose.msra.mxu0 0
        %1427 = vmatpush.bf16.xpose.msra.mxu0 0
        %1428 = vmatpush.bf16.xpose.msra.mxu0 0
        %1429 = vmatpush.bf16.xpose.msra.mxu0 0
        %1430 = vmatpush.bf16.xpose.msra.mxu0 0
        %1431 = vmatpush.bf16.xpose.msra.mxu0 0
        %1432 = vmatpush.bf16.xpose.msra.mxu0 %v1423
        %1433 = vmatmul.bf16.gmra.mxu0 %v1420
        %v1434 = vpop.f32.mrf.mxu0
        %v1435 = vadd.f32 0.0, %v1434
        %v1436 = vpop.f32.mrf.mxu0
        %1437 = vdwg.mxu0
        %v1438 = vmul.f32 %v1416, 0.25
        %v1439 = vmul.f32 %v1435, 0.25
        %v1440 = vadd.f32 %v1438, %v1010
        %v1441 = vadd.f32 %v1439, %v1010
        %vm1442 = vcmask 64512
        %v1443 = vsel %vm1442, %v1440, -inf
        %1444 = vmax.xlane.f32.xlu0 %v1443
        %v1445 = vpop.xlane.xlu0 %1444
        %v1446 = vsel %vm1442, %v1441, -inf
        %1447 = vmax.xlane.f32.xlu0 %v1446
        %v1448 = vpop.xlane.xlu0 %1447
        %v1449 = vsub.f32 %v1440, %v1445
        %v1450 = vsub.f32 %v1441, %v1448
        %v1451 = vmul.f32 %v1449, 1.442695
        %v1452 = vpow.pop %v1451
        %v1453 = vmul.f32 %v1450, 1.442695
        %v1454 = vpow.pop %v1453
        %v1455 = vsel %vm1442, %v1452, 0.0
        %1456 = vadd.xlane.f32.xlu0 %v1455
        %v1457 = vpop.xlane.xlu0 %1456
        %v1458 = vsel %vm1442, %v1454, 0.0
        %1459 = vadd.xlane.f32.xlu0 %v1458
        %v1460 = vpop.xlane.xlu0 %1459
        %v1461 = vrcp.pop %v1457
        %v1462 = vrcp.pop %v1460
        %v1463 = vmul.f32 %v1452, %v1461
        %v1464 = vmul.f32 %v1454, %v1462
        %v1465 = vpack.c.bf16 %v1463, %v1463
        %v1466 = vpack.c.bf16 %v1464, %v1464
        %v1468 = vsel %vm1442, %v1465, 0
        %vm1470 = vcmask 1043456
        %v1472 = vsel %vm1470, %v1397, 0
        %1474 = vmatpush.bf16.msra.mxu0 0
        %1475 = vmatpush.bf16.msra.mxu0 0
        %1476 = vmatpush.bf16.msra.mxu0 0
        %1477 = vmatpush.bf16.msra.mxu0 0
        %1478 = vmatpush.bf16.msra.mxu0 0
        %1479 = vmatpush.bf16.msra.mxu0 0
        %1480 = vmatpush.bf16.msra.mxu0 0
        %1481 = vmatpush.bf16.msra.mxu0 %v1472
        %1482 = vmatmul.bf16.gmra.mxu0 %v1468
        %v1483 = vpop.f32.mrf.mxu0
        %v1484 = vadd.f32 0.0, %v1483
        %v1485 = vpop.f32.mrf.mxu0
        %1486 = vdwg.mxu0
        %v1488 = vsel %vm1442, %v1466, 0
        %v1491 = vsel %vm1470, %v1398, 0
        %1493 = vmatpush.bf16.msra.mxu0 0
        %1494 = vmatpush.bf16.msra.mxu0 0
        %1495 = vmatpush.bf16.msra.mxu0 0
        %1496 = vmatpush.bf16.msra.mxu0 0
        %1497 = vmatpush.bf16.msra.mxu0 0
        %1498 = vmatpush.bf16.msra.mxu0 0
        %1499 = vmatpush.bf16.msra.mxu0 0
        %1500 = vmatpush.bf16.msra.mxu0 %v1491
        %1501 = vmatmul.bf16.gmra.mxu0 %v1488
        %v1502 = vpop.f32.mrf.mxu0
        %v1503 = vadd.f32 0.0, %v1502
        %v1504 = vpop.f32.mrf.mxu0
        %1505 = vdwg.mxu0
        %v1506 = vrot.slane %v1484, 4
        %v1507 = vsel %vm1115, 0.0, %v1506
        %v1509 = vunpack.c.l.s4 1983009808
        %v1510 = vunpack.c.0.s8 %v1509
        %v1511 = vperm.slane %v1484, %v1510
        %v1513 = vunpack.c.l.s4 1983009808
        %v1514 = vunpack.c.0.s8 %v1513
        %v1515 = vperm.slane %v1507, %v1514
        %v1516 = vrot.slane %v1503, 4
        %v1517 = vsel %vm1115, 0.0, %v1516
        %v1519 = vunpack.c.l.s4 1983009808
        %v1520 = vunpack.c.0.s8 %v1519
        %v1521 = vperm.slane %v1503, %v1520
        %v1523 = vunpack.c.l.s4 1983009808
        %v1524 = vunpack.c.0.s8 %v1523
        %v1525 = vperm.slane %v1517, %v1524
        %v1526 = vrot.slane %v1521, 4
        %v1527 = vsel %vm1115, %v1526, %v1511
        %v1528 = vrot.slane %v1511, 4
        %v1529 = vsel %vm1115, %v1521, %v1528
        %v1531 = vunpack.c.l.s4 1934713408
        %v1532 = vunpack.c.0.s8 %v1531
        %v1533 = vperm.slane %v1527, %v1532
        %v1535 = vunpack.c.l.s4 1934713408
        %v1536 = vunpack.c.0.s8 %v1535
        %v1537 = vperm.slane %v1529, %v1536
        %v1538 = vrot.slane %v1525, 4
        %v1539 = vsel %vm1115, %v1538, %v1515
        %v1540 = vrot.slane %v1515, 4
        %v1541 = vsel %vm1115, %v1525, %v1540
        %v1543 = vunpack.c.l.s4 1934713408
        %v1544 = vunpack.c.0.s8 %v1543
        %v1545 = vperm.slane %v1539, %v1544
        %v1547 = vunpack.c.l.s4 1934713408
        %v1548 = vunpack.c.0.s8 %v1547
        %v1549 = vperm.slane %v1541, %v1548
        %v1550 = vrot.slane %v1533, 4
        %v1551 = vsel %vm1115, 0.0, %v1550
        %v1552 = vrot.slane %v1537, 4
        %v1553 = vsel %vm1115, 0.0, %v1552
        %v1554 = vrot.slane %v1545, 4
        %v1555 = vsel %vm1115, 0.0, %v1554
        %v1556 = vrot.slane %v1549, 4
        %v1557 = vsel %vm1115, 0.0, %v1556
        %v1558 = vsel %vm1115, %v1552, %v1533
        %v1560 = vunpack.c.l.s4 1983009808
        %v1561 = vunpack.c.0.s8 %v1560
        %v1562 = vperm.slane %v1558, %v1561
        %v1563 = vrot.slane %v1553, 4
        %v1564 = vsel %vm1115, %v1563, %v1551
        %v1566 = vunpack.c.l.s4 1983009808
        %v1567 = vunpack.c.0.s8 %v1566
        %v1568 = vperm.slane %v1564, %v1567
        %v1569 = vsel %vm1115, %v1556, %v1545
        %v1571 = vunpack.c.l.s4 1983009808
        %v1572 = vunpack.c.0.s8 %v1571
        %v1573 = vperm.slane %v1569, %v1572
        %v1574 = vrot.slane %v1557, 4
        %v1575 = vsel %vm1115, %v1574, %v1555
        %v1577 = vunpack.c.l.s4 1983009808
        %v1578 = vunpack.c.0.s8 %v1577
        %v1579 = vperm.slane %v1575, %v1578
        %v1580 = vrot.slane %v1568, 4
        %v1581 = vsel %vm1115, %v1580, %v1562
        %v1583 = vunpack.c.l.s4 1934713408
        %v1584 = vunpack.c.0.s8 %v1583
        %v1585 = vperm.slane %v1581, %v1584
        %v1586 = vrot.slane %v1579, 4
        %v1587 = vsel %vm1115, %v1586, %v1573
        %v1589 = vunpack.c.l.s4 1934713408
        %v1590 = vunpack.c.0.s8 %v1589
        %v1591 = vperm.slane %v1587, %v1590
        %v1592 = vrot.slane %v1591, 4
        %v1593 = vsel %vm1115, %v1592, %v1585
        %v1594 = vrot.slane %v1585, 4
        %v1595 = vsel %vm1115, %v1591, %v1594
        %1597 = vrot.lane.b32.xlu0 %v1595, 16
        %v1598 = vpop.permute.xlu0 %1597
        %v1600 = vsel %vm1399, %v1593, %v1598
        %v1601 = vpack.c.bf16 %v1600, %v1600
        %v1602 = vperm.slane %v1008, 3
        %v1607 = vunpack.c.l.b16 %v1024
        %v1608 = vunpack.c.l.b16 %v1025
        %v1609 = vunpack.c.l.b16 %v1026
        %v1610 = vunpack.c.l.b16 %v1027
        %v1611 = vpack.c.b16 %v1608, %v1607
        %v1612 = vpack.c.b16 %v1610, %v1609
        %v1616 = vsel %vm1041, %v1601, 0
        %1618 = vmatpush.bf16.msra.mxu0 0
        %1619 = vmatpush.bf16.msra.mxu0 0
        %1620 = vmatpush.bf16.msra.mxu0 0
        %1621 = vmatpush.bf16.msra.mxu0 0
        %1622 = vmatpush.bf16.msra.mxu0 0
        %1623 = vmatpush.bf16.msra.mxu0 0
        %1624 = vmatpush.bf16.msra.mxu0 %v1612
        %1625 = vmatpush.bf16.msra.mxu0 %v1611
        %1626 = vmatmul.bf16.gmra.mxu0 %v1616
        %v1627 = vpop.f32.mrf.mxu0
        %v1628 = vadd.f32 %v1602, %v1627
        %v1629 = vpop.f32.mrf.mxu0
        %1630 = vdwg.mxu0
        %v1631 = vadd.f32 %v1628, %v1004
        %v1632 = vsel %vm1041, %v1631, 0.0
        %1633 = vadd.xlane.f32.xlu0 %v1632
        %v1634 = vpop.xlane.xlu0 %1633
        %v1635 = vrcp.pop 32.0
        %v1636 = vmul.f32 32.0, %v1635
        %v1637 = vsub.f32 1.0, %v1636
        %v1638 = vmul.f32 %v1635, %v1637
        %v1639 = vadd.f32 %v1635, %v1638
        %vm1640 = vweird.f32 %v1635
        %v1641 = vsel %vm1640, %v1635, %v1639
        %v1642 = vmul.f32 %v1634, %v1641
        %v1643 = vsub.f32 %v1631, %v1642
        %v1644 = vmul.f32 %v1643, %v1643
        %v1645 = vsel %vm1041, %v1644, 0.0
        %1646 = vadd.xlane.f32.xlu0 %v1645
        %v1647 = vpop.xlane.xlu0 %1646
        %v1648 = vmul.f32 %v1647, %v1641
        %v1649 = vadd.f32 %v1648, 1e-05
        %v1650 = vrsqrt.pop %v1649
        %v1651 = vmul.f32 %v1650, %v1649
        %v1652 = vmul.f32 %v1651, %v1650
        %v1653 = vmul.f32 0.5, %v1652
        %v1654 = vsub.f32 1.5, %v1653
        %v1655 = vmul.f32 %v1650, %v1654
        %vm1656 = vweird.f32 %v1649
        %vm1657 = vweird.f32 %v1650
        %vm1658 = vmor %vm1656, %vm1657
        %v1659 = vsel %vm1658, %v1650, %v1655
        %v1660 = vmul.f32 %v1643, %v1659
        %v1661 = vperm.slane %v1008, 4
        %v1662 = vmul.f32 %v1660, %v1661
        %v1663 = vperm.slane %v1008, 5
        %v1664 = vadd.f32 %v1662, %v1663
        %v1665 = vpack.c.bf16 %v1664, %v1664
        %v1666 = vld [vmem:[%s809] sm:$0xf]
        %v1667 = vld [vmem:[%s809 + $0x4] sm:$0xf]
        %v1668 = vld [vmem:[%s809 + $0x8] sm:$0xf]
        %v1669 = vld [vmem:[%s809 + $0xc] sm:$0xf]
        %v1670 = vld [vmem:[%s819] sm:$0xf]
        %v1671 = vld [vmem:[%s819 + $0x4] sm:$0xf]
        %v1672 = vld [vmem:[%s819 + $0x8] sm:$0xf]
        %v1673 = vld [vmem:[%s819 + $0xc] sm:$0xf]
        %v1674 = vld [vmem:[%s829] sm:$0xf]
        %v1675 = vld [vmem:[%s829 + $0x4] sm:$0xf]
        %v1676 = vld [vmem:[%s829 + $0x8] sm:$0xf]
        %v1677 = vld [vmem:[%s829 + $0xc] sm:$0xf]
        %v1678 = vld [vmem:[%s839] sm:$0xf]
        %v1679 = vld [vmem:[%s839 + $0x4] sm:$0xf]
        %v1680 = vld [vmem:[%s839 + $0x8] sm:$0xf]
        %v1681 = vld [vmem:[%s839 + $0xc] sm:$0xf]
        %v1682 = vperm.slane %v1008, 6
        %v1687 = vunpack.c.l.b16 %v1666
        %v1688 = vunpack.c.l.b16 %v1667
        %v1689 = vunpack.c.l.b16 %v1668
        %v1690 = vunpack.c.l.b16 %v1669
        %v1691 = vpack.c.b16 %v1688, %v1687
        %v1692 = vpack.c.b16 %v1690, %v1689
        %v1696 = vsel %vm1041, %v1665, 0
        %1698 = vmatpush.bf16.msra.mxu0 0
        %1699 = vmatpush.bf16.msra.mxu0 0
        %1700 = vmatpush.bf16.msra.mxu0 0
        %1701 = vmatpush.bf16.msra.mxu0 0
        %1702 = vmatpush.bf16.msra.mxu0 0
        %1703 = vmatpush.bf16.msra.mxu0 0
        %1704 = vmatpush.bf16.msra.mxu0 %v1692
        %1705 = vmatpush.bf16.msra.mxu0 %v1691
        %1706 = vmatmul.bf16.gmra.mxu0 %v1696
        %v1707 = vpop.f32.mrf.mxu0
        %v1708 = vadd.f32 %v1682, %v1707
        %v1709 = vpop.f32.mrf.mxu0
        %1710 = vdwg.mxu0
        %v1711 = vperm.slane %v1008, 7
        %v1716 = vunpack.c.l.b16 %v1670
        %v1717 = vunpack.c.l.b16 %v1671
        %v1718 = vunpack.c.l.b16 %v1672
        %v1719 = vunpack.c.l.b16 %v1673
        %v1720 = vpack.c.b16 %v1717, %v1716
        %v1721 = vpack.c.b16 %v1719, %v1718
        %v1725 = vsel %vm1041, %v1007, 0
        %1727 = vmatpush.bf16.msra.mxu0 0
        %1728 = vmatpush.bf16.msra.mxu0 0
        %1729 = vmatpush.bf16.msra.mxu0 0
        %1730 = vmatpush.bf16.msra.mxu0 0
        %1731 = vmatpush.bf16.msra.mxu0 0
        %1732 = vmatpush.bf16.msra.mxu0 0
        %1733 = vmatpush.bf16.msra.mxu0 %v1721
        %1734 = vmatpush.bf16.msra.mxu0 %v1720
        %1735 = vmatmul.bf16.gmra.mxu0 %v1725
        %v1736 = vpop.f32.mrf.mxu0
        %v1737 = vadd.f32 %v1711, %v1736
        %v1738 = vpop.f32.mrf.mxu0
        %1739 = vdwg.mxu0
        %v1740 = vperm.slane %v1009, 0
        %v1745 = vunpack.c.l.b16 %v1674
        %v1746 = vunpack.c.l.b16 %v1675
        %v1747 = vunpack.c.l.b16 %v1676
        %v1748 = vunpack.c.l.b16 %v1677
        %v1749 = vpack.c.b16 %v1746, %v1745
        %v1750 = vpack.c.b16 %v1748, %v1747
        %1753 = vmatpush.bf16.msra.mxu0 0
        %1754 = vmatpush.bf16.msra.mxu0 0
        %1755 = vmatpush.bf16.msra.mxu0 0
        %1756 = vmatpush.bf16.msra.mxu0 0
        %1757 = vmatpush.bf16.msra.mxu0 0
        %1758 = vmatpush.bf16.msra.mxu0 0
        %1759 = vmatpush.bf16.msra.mxu0 %v1750
        %1760 = vmatpush.bf16.msra.mxu0 %v1749
        %1761 = vmatmul.bf16.gmra.mxu0 %v1725
        %v1762 = vpop.f32.mrf.mxu0
        %v1763 = vadd.f32 %v1740, %v1762
        %v1764 = vpop.f32.mrf.mxu0
        %1765 = vdwg.mxu0
        %1767 = vrot.lane.b32.xlu0 %v1708, 112
        %v1768 = vpop.permute.xlu0 %1767
        %v1770 = vrot.slane %v1708, 4
        %v1771 = vsel %vm1115, 0.0, %v1770
        %v1773 = vunpack.c.l.s4 1983009808
        %v1774 = vunpack.c.0.s8 %v1773
        %v1775 = vperm.slane %v1708, %v1774
        %v1777 = vunpack.c.l.s4 1983009808
        %v1778 = vunpack.c.0.s8 %v1777
        %v1779 = vperm.slane %v1771, %v1778
        %v1780 = vrot.slane %v1768, 4
        %v1781 = vsel %vm1115, 0.0, %v1780
        %v1783 = vunpack.c.l.s4 1983009808
        %v1784 = vunpack.c.0.s8 %v1783
        %v1785 = vperm.slane %v1768, %v1784
        %v1787 = vunpack.c.l.s4 1983009808
        %v1788 = vunpack.c.0.s8 %v1787
        %v1789 = vperm.slane %v1781, %v1788
        %v1790 = vrot.slane %v1785, 4
        %v1791 = vsel %vm1115, %v1790, %v1775
        %v1792 = vrot.slane %v1775, 4
        %v1793 = vsel %vm1115, %v1785, %v1792
        %v1795 = vunpack.c.l.s4 1934713408
        %v1796 = vunpack.c.0.s8 %v1795
        %v1797 = vperm.slane %v1791, %v1796
        %v1799 = vunpack.c.l.s4 1934713408
        %v1800 = vunpack.c.0.s8 %v1799
        %v1801 = vperm.slane %v1793, %v1800
        %v1802 = vrot.slane %v1789, 4
        %v1803 = vsel %vm1115, %v1802, %v1779
        %v1804 = vrot.slane %v1779, 4
        %v1805 = vsel %vm1115, %v1789, %v1804
        %v1807 = vunpack.c.l.s4 1934713408
        %v1808 = vunpack.c.0.s8 %v1807
        %v1809 = vperm.slane %v1803, %v1808
        %v1811 = vunpack.c.l.s4 1934713408
        %v1812 = vunpack.c.0.s8 %v1811
        %v1813 = vperm.slane %v1805, %v1812
        %v1814 = vrot.slane %v1797, 4
        %v1815 = vsel %vm1115, 0.0, %v1814
        %v1816 = vrot.slane %v1801, 4
        %v1817 = vsel %vm1115, 0.0, %v1816
        %v1818 = vrot.slane %v1809, 4
        %v1819 = vsel %vm1115, 0.0, %v1818
        %v1820 = vrot.slane %v1813, 4
        %v1821 = vsel %vm1115, 0.0, %v1820
        %v1822 = vsel %vm1115, %v1816, %v1797
        %v1824 = vunpack.c.l.s4 1983009808
        %v1825 = vunpack.c.0.s8 %v1824
        %v1826 = vperm.slane %v1822, %v1825
        %v1827 = vrot.slane %v1817, 4
        %v1828 = vsel %vm1115, %v1827, %v1815
        %v1830 = vunpack.c.l.s4 1983009808
        %v1831 = vunpack.c.0.s8 %v1830
        %v1832 = vperm.slane %v1828, %v1831
        %v1833 = vsel %vm1115, %v1820, %v1809
        %v1835 = vunpack.c.l.s4 1983009808
        %v1836 = vunpack.c.0.s8 %v1835
        %v1837 = vperm.slane %v1833, %v1836
        %v1838 = vrot.slane %v1821, 4
        %v1839 = vsel %vm1115, %v1838, %v1819
        %v1841 = vunpack.c.l.s4 1983009808
        %v1842 = vunpack.c.0.s8 %v1841
        %v1843 = vperm.slane %v1839, %v1842
        %v1844 = vrot.slane %v1832, 4
        %v1845 = vsel %vm1115, %v1844, %v1826
        %v1847 = vunpack.c.l.s4 1934713408
        %v1848 = vunpack.c.0.s8 %v1847
        %v1849 = vperm.slane %v1845, %v1848
        %v1850 = vrot.slane %v1843, 4
        %v1851 = vsel %vm1115, %v1850, %v1837
        %v1853 = vunpack.c.l.s4 1934713408
        %v1854 = vunpack.c.0.s8 %v1853
        %v1855 = vperm.slane %v1851, %v1854
        %v1856 = vrot.slane %v1855, 4
        %v1857 = vsel %vm1115, %v1856, %v1849
        %v1858 = vrot.slane %v1849, 4
        %v1859 = vsel %vm1115, %v1855, %v1858
        %v1860 = vpack.c.bf16 %v1857, %v1857
        %v1861 = vpack.c.bf16 %v1859, %v1859
        %1863 = vrot.lane.b32.xlu0 %v1737, 112
        %v1864 = vpop.permute.xlu0 %1863
        %v1866 = vrot.slane %v1737, 4
        %v1867 = vsel %vm1115, 0.0, %v1866
        %v1869 = vunpack.c.l.s4 1983009808
        %v1870 = vunpack.c.0.s8 %v1869
        %v1871 = vperm.slane %v1737, %v1870
        %v1873 = vunpack.c.l.s4 1983009808
        %v1874 = vunpack.c.0.s8 %v1873
        %v1875 = vperm.slane %v1867, %v1874
        %v1876 = vrot.slane %v1864, 4
        %v1877 = vsel %vm1115, 0.0, %v1876
        %v1879 = vunpack.c.l.s4 1983009808
        %v1880 = vunpack.c.0.s8 %v1879
        %v1881 = vperm.slane %v1864, %v1880
        %v1883 = vunpack.c.l.s4 1983009808
        %v1884 = vunpack.c.0.s8 %v1883
        %v1885 = vperm.slane %v1877, %v1884
        %v1886 = vrot.slane %v1881, 4
        %v1887 = vsel %vm1115, %v1886, %v1871
        %v1888 = vrot.slane %v1871, 4
        %v1889 = vsel %vm1115, %v1881, %v1888
        %v1891 = vunpack.c.l.s4 1934713408
        %v1892 = vunpack.c.0.s8 %v1891
        %v1893 = vperm.slane %v1887, %v1892
        %v1895 = vunpack.c.l.s4 1934713408
        %v1896 = vunpack.c.0.s8 %v1895
        %v1897 = vperm.slane %v1889, %v1896
        %v1898 = vrot.slane %v1885, 4
        %v1899 = vsel %vm1115, %v1898, %v1875
        %v1900 = vrot.slane %v1875, 4
        %v1901 = vsel %vm1115, %v1885, %v1900
        %v1903 = vunpack.c.l.s4 1934713408
        %v1904 = vunpack.c.0.s8 %v1903
        %v1905 = vperm.slane %v1899, %v1904
        %v1907 = vunpack.c.l.s4 1934713408
        %v1908 = vunpack.c.0.s8 %v1907
        %v1909 = vperm.slane %v1901, %v1908
        %v1910 = vrot.slane %v1893, 4
        %v1911 = vsel %vm1115, 0.0, %v1910
        %v1912 = vrot.slane %v1897, 4
        %v1913 = vsel %vm1115, 0.0, %v1912
        %v1914 = vrot.slane %v1905, 4
        %v1915 = vsel %vm1115, 0.0, %v1914
        %v1916 = vrot.slane %v1909, 4
        %v1917 = vsel %vm1115, 0.0, %v1916
        %v1918 = vsel %vm1115, %v1912, %v1893
        %v1920 = vunpack.c.l.s4 1983009808
        %v1921 = vunpack.c.0.s8 %v1920
        %v1922 = vperm.slane %v1918, %v1921
        %v1923 = vrot.slane %v1913, 4
        %v1924 = vsel %vm1115, %v1923, %v1911
        %v1926 = vunpack.c.l.s4 1983009808
        %v1927 = vunpack.c.0.s8 %v1926
        %v1928 = vperm.slane %v1924, %v1927
        %v1929 = vsel %vm1115, %v1916, %v1905
        %v1931 = vunpack.c.l.s4 1983009808
        %v1932 = vunpack.c.0.s8 %v1931
        %v1933 = vperm.slane %v1929, %v1932
        %v1934 = vrot.slane %v1917, 4
        %v1935 = vsel %vm1115, %v1934, %v1915
        %v1937 = vunpack.c.l.s4 1983009808
        %v1938 = vunpack.c.0.s8 %v1937
        %v1939 = vperm.slane %v1935, %v1938
        %v1940 = vrot.slane %v1928, 4
        %v1941 = vsel %vm1115, %v1940, %v1922
        %v1943 = vunpack.c.l.s4 1934713408
        %v1944 = vunpack.c.0.s8 %v1943
        %v1945 = vperm.slane %v1941, %v1944
        %v1946 = vrot.slane %v1939, 4
        %v1947 = vsel %vm1115, %v1946, %v1933
        %v1949 = vunpack.c.l.s4 1934713408
        %v1950 = vunpack.c.0.s8 %v1949
        %v1951 = vperm.slane %v1947, %v1950
        %v1952 = vrot.slane %v1951, 4
        %v1953 = vsel %vm1115, %v1952, %v1945
        %v1954 = vrot.slane %v1945, 4
        %v1955 = vsel %vm1115, %v1951, %v1954
        %v1956 = vpack.c.bf16 %v1953, %v1953
        %v1957 = vpack.c.bf16 %v1955, %v1955
        %1959 = vrot.lane.b32.xlu0 %v1763, 112
        %v1960 = vpop.permute.xlu0 %1959
        %v1962 = vrot.slane %v1763, 4
        %v1963 = vsel %vm1115, 0.0, %v1962
        %v1965 = vunpack.c.l.s4 1983009808
        %v1966 = vunpack.c.0.s8 %v1965
        %v1967 = vperm.slane %v1763, %v1966
        %v1969 = vunpack.c.l.s4 1983009808
        %v1970 = vunpack.c.0.s8 %v1969
        %v1971 = vperm.slane %v1963, %v1970
        %v1972 = vrot.slane %v1960, 4
        %v1973 = vsel %vm1115, 0.0, %v1972
        %v1975 = vunpack.c.l.s4 1983009808
        %v1976 = vunpack.c.0.s8 %v1975
        %v1977 = vperm.slane %v1960, %v1976
        %v1979 = vunpack.c.l.s4 1983009808
        %v1980 = vunpack.c.0.s8 %v1979
        %v1981 = vperm.slane %v1973, %v1980
        %v1982 = vrot.slane %v1977, 4
        %v1983 = vsel %vm1115, %v1982, %v1967
        %v1984 = vrot.slane %v1967, 4
        %v1985 = vsel %vm1115, %v1977, %v1984
        %v1987 = vunpack.c.l.s4 1934713408
        %v1988 = vunpack.c.0.s8 %v1987
        %v1989 = vperm.slane %v1983, %v1988
        %v1991 = vunpack.c.l.s4 1934713408
        %v1992 = vunpack.c.0.s8 %v1991
        %v1993 = vperm.slane %v1985, %v1992
        %v1994 = vrot.slane %v1981, 4
        %v1995 = vsel %vm1115, %v1994, %v1971
        %v1996 = vrot.slane %v1971, 4
        %v1997 = vsel %vm1115, %v1981, %v1996
        %v1999 = vunpack.c.l.s4 1934713408
        %v2000 = vunpack.c.0.s8 %v1999
        %v2001 = vperm.slane %v1995, %v2000
        %v2003 = vunpack.c.l.s4 1934713408
        %v2004 = vunpack.c.0.s8 %v2003
        %v2005 = vperm.slane %v1997, %v2004
        %v2006 = vrot.slane %v1989, 4
        %v2007 = vsel %vm1115, 0.0, %v2006
        %v2008 = vrot.slane %v1993, 4
        %v2009 = vsel %vm1115, 0.0, %v2008
        %v2010 = vrot.slane %v2001, 4
        %v2011 = vsel %vm1115, 0.0, %v2010
        %v2012 = vrot.slane %v2005, 4
        %v2013 = vsel %vm1115, 0.0, %v2012
        %v2014 = vsel %vm1115, %v2008, %v1989
        %v2016 = vunpack.c.l.s4 1983009808
        %v2017 = vunpack.c.0.s8 %v2016
        %v2018 = vperm.slane %v2014, %v2017
        %v2019 = vrot.slane %v2009, 4
        %v2020 = vsel %vm1115, %v2019, %v2007
        %v2022 = vunpack.c.l.s4 1983009808
        %v2023 = vunpack.c.0.s8 %v2022
        %v2024 = vperm.slane %v2020, %v2023
        %v2025 = vsel %vm1115, %v2012, %v2001
        %v2027 = vunpack.c.l.s4 1983009808
        %v2028 = vunpack.c.0.s8 %v2027
        %v2029 = vperm.slane %v2025, %v2028
        %v2030 = vrot.slane %v2013, 4
        %v2031 = vsel %vm1115, %v2030, %v2011
        %v2033 = vunpack.c.l.s4 1983009808
        %v2034 = vunpack.c.0.s8 %v2033
        %v2035 = vperm.slane %v2031, %v2034
        %v2036 = vrot.slane %v2024, 4
        %v2037 = vsel %vm1115, %v2036, %v2018
        %v2039 = vunpack.c.l.s4 1934713408
        %v2040 = vunpack.c.0.s8 %v2039
        %v2041 = vperm.slane %v2037, %v2040
        %v2042 = vrot.slane %v2035, 4
        %v2043 = vsel %vm1115, %v2042, %v2029
        %v2045 = vunpack.c.l.s4 1934713408
        %v2046 = vunpack.c.0.s8 %v2045
        %v2047 = vperm.slane %v2043, %v2046
        %v2048 = vrot.slane %v2047, 4
        %v2049 = vsel %vm1115, %v2048, %v2041
        %v2050 = vrot.slane %v2041, 4
        %v2051 = vsel %vm1115, %v2047, %v2050
        %v2052 = vpack.c.bf16 %v2049, %v2049
        %v2053 = vpack.c.bf16 %v2051, %v2051
        %v2055 = vsel %vm1399, %v1860, 0
        %v2058 = vsel %vm1399, %v1956, 0
        %2060 = vmatpush.bf16.xpose.msra.mxu0 0
        %2061 = vmatpush.bf16.xpose.msra.mxu0 0
        %2062 = vmatpush.bf16.xpose.msra.mxu0 0
        %2063 = vmatpush.bf16.xpose.msra.mxu0 0
        %2064 = vmatpush.bf16.xpose.msra.mxu0 0
        %2065 = vmatpush.bf16.xpose.msra.mxu0 0
        %2066 = vmatpush.bf16.xpose.msra.mxu0 0
        %2067 = vmatpush.bf16.xpose.msra.mxu0 %v2058
        %2068 = vmatmul.bf16.gmra.mxu0 %v2055
        %v2069 = vpop.f32.mrf.mxu0
        %v2070 = vadd.f32 0.0, %v2069
        %v2071 = vpop.f32.mrf.mxu0
        %2072 = vdwg.mxu0
        %v2074 = vsel %vm1399, %v1861, 0
        %v2077 = vsel %vm1399, %v1957, 0
        %2079 = vmatpush.bf16.xpose.msra.mxu0 0
        %2080 = vmatpush.bf16.xpose.msra.mxu0 0
        %2081 = vmatpush.bf16.xpose.msra.mxu0 0
        %2082 = vmatpush.bf16.xpose.msra.mxu0 0
        %2083 = vmatpush.bf16.xpose.msra.mxu0 0
        %2084 = vmatpush.bf16.xpose.msra.mxu0 0
        %2085 = vmatpush.bf16.xpose.msra.mxu0 0
        %2086 = vmatpush.bf16.xpose.msra.mxu0 %v2077
        %2087 = vmatmul.bf16.gmra.mxu0 %v2074
        %v2088 = vpop.f32.mrf.mxu0
        %v2089 = vadd.f32 0.0, %v2088
        %v2090 = vpop.f32.mrf.mxu0
        %2091 = vdwg.mxu0
        %v2092 = vmul.f32 %v2070, 0.25
        %v2093 = vmul.f32 %v2089, 0.25
        %v2095 = vperm.slane %v1011, 0
        %v2097 = vadd.f32 %v2092, %v2095
        %v2098 = vadd.f32 %v2093, %v2095
        %v2099 = vsel %vm1442, %v2097, -inf
        %2100 = vmax.xlane.f32.xlu0 %v2099
        %v2101 = vpop.xlane.xlu0 %2100
        %v2102 = vsel %vm1442, %v2098, -inf
        %2103 = vmax.xlane.f32.xlu0 %v2102
        %v2104 = vpop.xlane.xlu0 %2103
        %v2105 = vsub.f32 %v2097, %v2101
        %v2106 = vsub.f32 %v2098, %v2104
        %v2107 = vmul.f32 %v2105, 1.442695
        %v2108 = vpow.pop %v2107
        %v2109 = vmul.f32 %v2106, 1.442695
        %v2110 = vpow.pop %v2109
        %v2111 = vsel %vm1442, %v2108, 0.0
        %2112 = vadd.xlane.f32.xlu0 %v2111
        %v2113 = vpop.xlane.xlu0 %2112
        %v2114 = vsel %vm1442, %v2110, 0.0
        %2115 = vadd.xlane.f32.xlu0 %v2114
        %v2116 = vpop.xlane.xlu0 %2115
        %v2117 = vrcp.pop %v2113
        %v2118 = vrcp.pop %v2116
        %v2119 = vmul.f32 %v2108, %v2117
        %v2120 = vmul.f32 %v2110, %v2118
        %v2121 = vpack.c.bf16 %v2119, %v2119
        %v2122 = vpack.c.bf16 %v2120, %v2120
        %v2124 = vsel %vm1442, %v2121, 0
        %v2127 = vsel %vm1470, %v2052, 0
        %2129 = vmatpush.bf16.msra.mxu0 0
        %2130 = vmatpush.bf16.msra.mxu0 0
        %2131 = vmatpush.bf16.msra.mxu0 0
        %2132 = vmatpush.bf16.msra.mxu0 0
        %2133 = vmatpush.bf16.msra.mxu0 0
        %2134 = vmatpush.bf16.msra.mxu0 0
        %2135 = vmatpush.bf16.msra.mxu0 0
        %2136 = vmatpush.bf16.msra.mxu0 %v2127
        %2137 = vmatmul.bf16.gmra.mxu0 %v2124
        %v2138 = vpop.f32.mrf.mxu0
        %v2139 = vadd.f32 0.0, %v2138
        %v2140 = vpop.f32.mrf.mxu0
        %2141 = vdwg.mxu0
        %v2143 = vsel %vm1442, %v2122, 0
        %v2146 = vsel %vm1470, %v2053, 0
        %2148 = vmatpush.bf16.msra.mxu0 0
        %2149 = vmatpush.bf16.msra.mxu0 0
        %2150 = vmatpush.bf16.msra.mxu0 0
        %2151 = vmatpush.bf16.msra.mxu0 0
        %2152 = vmatpush.bf16.msra.mxu0 0
        %2153 = vmatpush.bf16.msra.mxu0 0
        %2154 = vmatpush.bf16.msra.mxu0 0
        %2155 = vmatpush.bf16.msra.mxu0 %v2146
        %2156 = vmatmul.bf16.gmra.mxu0 %v2143
        %v2157 = vpop.f32.mrf.mxu0
        %v2158 = vadd.f32 0.0, %v2157
        %v2159 = vpop.f32.mrf.mxu0
        %2160 = vdwg.mxu0
        %v2161 = vrot.slane %v2139, 4
        %v2162 = vsel %vm1115, 0.0, %v2161
        %v2164 = vunpack.c.l.s4 1983009808
        %v2165 = vunpack.c.0.s8 %v2164
        %v2166 = vperm.slane %v2139, %v2165
        %v2168 = vunpack.c.l.s4 1983009808
        %v2169 = vunpack.c.0.s8 %v2168
        %v2170 = vperm.slane %v2162, %v2169
        %v2171 = vrot.slane %v2158, 4
        %v2172 = vsel %vm1115, 0.0, %v2171
        %v2174 = vunpack.c.l.s4 1983009808
        %v2175 = vunpack.c.0.s8 %v2174
        %v2176 = vperm.slane %v2158, %v2175
        %v2178 = vunpack.c.l.s4 1983009808
        %v2179 = vunpack.c.0.s8 %v2178
        %v2180 = vperm.slane %v2172, %v2179
        %v2181 = vrot.slane %v2176, 4
        %v2182 = vsel %vm1115, %v2181, %v2166
        %v2183 = vrot.slane %v2166, 4
        %v2184 = vsel %vm1115, %v2176, %v2183
        %v2186 = vunpack.c.l.s4 1934713408
        %v2187 = vunpack.c.0.s8 %v2186
        %v2188 = vperm.slane %v2182, %v2187
        %v2190 = vunpack.c.l.s4 1934713408
        %v2191 = vunpack.c.0.s8 %v2190
        %v2192 = vperm.slane %v2184, %v2191
        %v2193 = vrot.slane %v2180, 4
        %v2194 = vsel %vm1115, %v2193, %v2170
        %v2195 = vrot.slane %v2170, 4
        %v2196 = vsel %vm1115, %v2180, %v2195
        %v2198 = vunpack.c.l.s4 1934713408
        %v2199 = vunpack.c.0.s8 %v2198
        %v2200 = vperm.slane %v2194, %v2199
        %v2202 = vunpack.c.l.s4 1934713408
        %v2203 = vunpack.c.0.s8 %v2202
        %v2204 = vperm.slane %v2196, %v2203
        %v2205 = vrot.slane %v2188, 4
        %v2206 = vsel %vm1115, 0.0, %v2205
        %v2207 = vrot.slane %v2192, 4
        %v2208 = vsel %vm1115, 0.0, %v2207
        %v2209 = vrot.slane %v2200, 4
        %v2210 = vsel %vm1115, 0.0, %v2209
        %v2211 = vrot.slane %v2204, 4
        %v2212 = vsel %vm1115, 0.0, %v2211
        %v2213 = vsel %vm1115, %v2207, %v2188
        %v2215 = vunpack.c.l.s4 1983009808
        %v2216 = vunpack.c.0.s8 %v2215
        %v2217 = vperm.slane %v2213, %v2216
        %v2218 = vrot.slane %v2208, 4
        %v2219 = vsel %vm1115, %v2218, %v2206
        %v2221 = vunpack.c.l.s4 1983009808
        %v2222 = vunpack.c.0.s8 %v2221
        %v2223 = vperm.slane %v2219, %v2222
        %v2224 = vsel %vm1115, %v2211, %v2200
        %v2226 = vunpack.c.l.s4 1983009808
        %v2227 = vunpack.c.0.s8 %v2226
        %v2228 = vperm.slane %v2224, %v2227
        %v2229 = vrot.slane %v2212, 4
        %v2230 = vsel %vm1115, %v2229, %v2210
        %v2232 = vunpack.c.l.s4 1983009808
        %v2233 = vunpack.c.0.s8 %v2232
        %v2234 = vperm.slane %v2230, %v2233
        %v2235 = vrot.slane %v2223, 4
        %v2236 = vsel %vm1115, %v2235, %v2217
        %v2238 = vunpack.c.l.s4 1934713408
        %v2239 = vunpack.c.0.s8 %v2238
        %v2240 = vperm.slane %v2236, %v2239
        %v2241 = vrot.slane %v2234, 4
        %v2242 = vsel %vm1115, %v2241, %v2228
        %v2244 = vunpack.c.l.s4 1934713408
        %v2245 = vunpack.c.0.s8 %v2244
        %v2246 = vperm.slane %v2242, %v2245
        %v2247 = vrot.slane %v2246, 4
        %v2248 = vsel %vm1115, %v2247, %v2240
        %v2249 = vrot.slane %v2240, 4
        %v2250 = vsel %vm1115, %v2246, %v2249
        %2252 = vrot.lane.b32.xlu0 %v2250, 16
        %v2253 = vpop.permute.xlu0 %2252
        %v2255 = vsel %vm1399, %v2248, %v2253
        %v2256 = vpack.c.bf16 %v2255, %v2255
        %v2257 = vperm.slane %v1009, 1
        %v2262 = vunpack.c.l.b16 %v1678
        %v2263 = vunpack.c.l.b16 %v1679
        %v2264 = vunpack.c.l.b16 %v1680
        %v2265 = vunpack.c.l.b16 %v1681
        %v2266 = vpack.c.b16 %v2263, %v2262
        %v2267 = vpack.c.b16 %v2265, %v2264
        %v2271 = vsel %vm1041, %v2256, 0
        %2273 = vmatpush.bf16.msra.mxu0 0
        %2274 = vmatpush.bf16.msra.mxu0 0
        %2275 = vmatpush.bf16.msra.mxu0 0
        %2276 = vmatpush.bf16.msra.mxu0 0
        %2277 = vmatpush.bf16.msra.mxu0 0
        %2278 = vmatpush.bf16.msra.mxu0 0
        %2279 = vmatpush.bf16.msra.mxu0 %v2267
        %2280 = vmatpush.bf16.msra.mxu0 %v2266
        %2281 = vmatmul.bf16.gmra.mxu0 %v2271
        %v2282 = vpop.f32.mrf.mxu0
        %v2283 = vadd.f32 %v2257, %v2282
        %v2284 = vpop.f32.mrf.mxu0
        %2285 = vdwg.mxu0
        %v2286 = vadd.f32 %v2283, %v1664
        %v2287 = vsel %vm1041, %v2286, 0.0
        %2288 = vadd.xlane.f32.xlu0 %v2287
        %v2289 = vpop.xlane.xlu0 %2288
        %v2290 = vmul.f32 %v2289, %v1641
        %v2291 = vsub.f32 %v2286, %v2290
        %v2292 = vmul.f32 %v2291, %v2291
        %v2293 = vsel %vm1041, %v2292, 0.0
        %2294 = vadd.xlane.f32.xlu0 %v2293
        %v2295 = vpop.xlane.xlu0 %2294
        %v2296 = vmul.f32 %v2295, %v1641
        %v2297 = vadd.f32 %v2296, 1e-05
        %v2298 = vrsqrt.pop %v2297
        %v2299 = vmul.f32 %v2298, %v2297
        %v2300 = vmul.f32 %v2299, %v2298
        %v2301 = vmul.f32 0.5, %v2300
        %v2302 = vsub.f32 1.5, %v2301
        %v2303 = vmul.f32 %v2298, %v2302
        %vm2304 = vweird.f32 %v2297
        %vm2305 = vweird.f32 %v2298
        %vm2306 = vmor %vm2304, %vm2305
        %v2307 = vsel %vm2306, %v2298, %v2303
        %v2308 = vmul.f32 %v2291, %v2307
        %v2309 = vperm.slane %v1009, 2
        %v2310 = vmul.f32 %v2308, %v2309
        %v2311 = vperm.slane %v1009, 3
        %v2312 = vadd.f32 %v2310, %v2311
        %v2313 = vpack.c.bf16 %v2312, %v2312
        %v2314 = vld [vmem:[%s849] sm:$0xf]
        %v2315 = vld [vmem:[%s849 + $0x4] sm:$0xf]
        %v2316 = vld [vmem:[%s849 + $0x8] sm:$0xf]
        %v2317 = vld [vmem:[%s849 + $0xc] sm:$0xf]
        %v2318 = vperm.slane %v1009, 4
        %v2323 = vunpack.c.l.b16 %v2314
        %v2324 = vunpack.c.l.b16 %v2315
        %v2325 = vunpack.c.l.b16 %v2316
        %v2326 = vunpack.c.l.b16 %v2317
        %v2327 = vpack.c.b16 %v2324, %v2323
        %v2328 = vpack.c.b16 %v2326, %v2325
        %v2332 = vsel %vm1041, %v2313, 0
        %2334 = vmatpush.bf16.msra.mxu0 0
        %2335 = vmatpush.bf16.msra.mxu0 0
        %2336 = vmatpush.bf16.msra.mxu0 0
        %2337 = vmatpush.bf16.msra.mxu0 0
        %2338 = vmatpush.bf16.msra.mxu0 0
        %2339 = vmatpush.bf16.msra.mxu0 0
        %2340 = vmatpush.bf16.msra.mxu0 %v2328
        %2341 = vmatpush.bf16.msra.mxu0 %v2327
        %2342 = vmatmul.bf16.gmra.mxu0 %v2332
        %v2343 = vpop.f32.mrf.mxu0
        %v2344 = vadd.f32 %v2318, %v2343
        %v2345 = vpop.f32.mrf.mxu0
        %2346 = vdwg.mxu0
        %v2347 = vmax.f32 %v2344, 0.0
        %v2348 = vpack.c.bf16 %v2347, %v2347
        %v2349 = vld [vmem:[%s995] sm:$0xf]
        %v2350 = vld [vmem:[%s995 + $0x4] sm:$0xf]
        %v2351 = vld [vmem:[%s995 + $0x8] sm:$0xf]
        %v2352 = vld [vmem:[%s995 + $0xc] sm:$0xf]
        %v2353 = vld [vmem:[%s995 + $0x10] sm:$0xf]
        %v2354 = vld [vmem:[%s995 + $0x14] sm:$0xf]
        %v2355 = vld [vmem:[%s995 + $0x18] sm:$0xf]
        %v2356 = vld [vmem:[%s995 + $0x1c] sm:$0xf]
        %v2357 = vperm.slane %v1009, 5
        %v2366 = vunpack.c.l.b16 %v2349
        %v2367 = vunpack.c.l.b16 %v2350
        %v2368 = vunpack.c.l.b16 %v2351
        %v2369 = vunpack.c.l.b16 %v2352
        %v2370 = vunpack.c.l.b16 %v2353
        %v2371 = vunpack.c.l.b16 %v2354
        %v2372 = vunpack.c.l.b16 %v2355
        %v2373 = vunpack.c.l.b16 %v2356
        %v2374 = vpack.c.b16 %v2367, %v2366
        %v2375 = vpack.c.b16 %v2369, %v2368
        %v2376 = vpack.c.b16 %v2371, %v2370
        %v2377 = vpack.c.b16 %v2373, %v2372
        %vm2382 = vcmask 523264
        %v2384 = vsel %vm2382, %v2348, 0
        %2386 = vmatpush.bf16.msra.mxu0 0
        %2387 = vmatpush.bf16.msra.mxu0 0
        %2388 = vmatpush.bf16.msra.mxu0 0
        %2389 = vmatpush.bf16.msra.mxu0 0
        %2390 = vmatpush.bf16.msra.mxu0 %v2377
        %2391 = vmatpush.bf16.msra.mxu0 %v2376
        %2392 = vmatpush.bf16.msra.mxu0 %v2375
        %2393 = vmatpush.bf16.msra.mxu0 %v2374
        %2394 = vmatmul.bf16.gmra.mxu0 %v2384
        %v2395 = vpop.f32.mrf.mxu0
        %v2396 = vadd.f32 %v2357, %v2395
        %v2397 = vpop.f32.mrf.mxu0
        %2398 = vdwg.mxu0
        %v2399 = vadd.f32 %v2396, %v2312
        %v2400 = vsel %vm1041, %v2399, 0.0
        %2401 = vadd.xlane.f32.xlu0 %v2400
        %v2402 = vpop.xlane.xlu0 %2401
        %v2403 = vmul.f32 %v2402, %v1641
        %v2404 = vsub.f32 %v2399, %v2403
        %v2405 = vmul.f32 %v2404, %v2404
        %v2406 = vsel %vm1041, %v2405, 0.0
        %2407 = vadd.xlane.f32.xlu0 %v2406
        %v2408 = vpop.xlane.xlu0 %2407
        %v2409 = vmul.f32 %v2408, %v1641
        %v2410 = vadd.f32 %v2409, 1e-05
        %v2411 = vrsqrt.pop %v2410
        %v2412 = vmul.f32 %v2411, %v2410
        %v2413 = vmul.f32 %v2412, %v2411
        %v2414 = vmul.f32 0.5, %v2413
        %v2415 = vsub.f32 1.5, %v2414
        %v2416 = vmul.f32 %v2411, %v2415
        %vm2417 = vweird.f32 %v2410
        %vm2418 = vweird.f32 %v2411
        %vm2419 = vmor %vm2417, %vm2418
        %v2420 = vsel %vm2419, %v2411, %v2416
        %v2421 = vmul.f32 %v2404, %v2420
        %v2422 = vperm.slane %v1009, 6
        %v2423 = vmul.f32 %v2421, %v2422
        %v2424 = vperm.slane %v1009, 7
        %v2425 = vadd.f32 %v2423, %v2424
        %2426 = vst.msk [vmem:[#allocation2] sm:$0xff] %vm1041, %v2425
        %p2427 = scmp.eq.s32.totalorder %s52, 1
        // Predicated region
        $region129: #{tpu_custom_call.1} parent=79 // pred_check
          %p2428 = pneg %p2427
        $region130: #{tpu_custom_call.1} parent=79 // pred_check_branch
          %2430 = sbr.rel (%p2428) target = $region132
        $region131: #{tpu_custom_call.1} parent=79 // pred_region
          %2431 = vst.msk [vmem:[%s975] sm:$0xff] %vm1041, %v2425
        $region132: #{tpu_custom_call.1} parent=79 // pred_fallthru
          _
        %s2432 = sand.u32 %s457, 1
        %s2433 = scalar_lea.sflag [#allocation5], %s2432
        %s2434 = sand.u32 %s457, 1
        %s2435 = smul.addr %s2434, 8
        %s2436 = scalar_lea.vmem [#allocation21], %s2435
        // Predicated region
        $region133: #{tpu_custom_call.1} parent=79 // pred_check
          %p2437 = pneg %p467
        $region134: #{tpu_custom_call.1} parent=79 // pred_check_branch
          %2439 = sbr.rel (%p2437) target = $region136
        $region135: #{tpu_custom_call.1} parent=79 // pred_region
          %2441 = vsyncadd %s2433, 0
          %s2442 = smul.addr %s51, 8
          %s2443 = scalar_lea.hbm %s15, %s2442
          %s2445 = sshll.u32 %s2436, 4
          %s2446 = int_to_ptr.vmem [resolvable:$true] %s2445
          %s2447 = sshll.u32 %s2443, 4
          %s2448 = int_to_ptr.hbm [resolvable:$true] %s2447
          %2450 = dma.vmem_to_hbm [thread:$0]  %s2446, 128, %s2448, %s2433
        $region136: #{tpu_custom_call.1} parent=79 // pred_fallthru
          _
      $region80: #{tpu_custom_call.1} parent=5 // pred_fallthru
        _
      %p2451 = scmp.le.s32.totalorder 2, %s42
      // Predicated region
      $region137: #{tpu_custom_call.1} parent=5 // pred_check
        %p2452 = pneg %p2451
      $region138: #{tpu_custom_call.1} parent=5 // pred_check_branch
        %2454 = sbr.rel (%p2452) target = $region140
      $region139: #{tpu_custom_call.1} parent=5 // pred_region
        %s2455 = ssub.s32 %s42, 2
        // Predicated region
        $region141: #{tpu_custom_call.1} parent=139 // pred_check
          %p2456 = pneg %p473
        $region142: #{tpu_custom_call.1} parent=139 // pred_check_branch
          %2458 = sbr.rel (%p2456) target = $region144
        $region143: #{tpu_custom_call.1} parent=139 // pred_region
          %s2459 = sand.u32 %s458, 1
          %s2460 = scalar_lea.sflag [#allocation5], %s2459
          %s2461 = sand.u32 %s458, 1
          %s2462 = smul.addr %s2461, 8
          %s2463 = scalar_lea.vmem [#allocation21], %s2462
          %2465 = dma.done %s2460, 128
        $region144: #{tpu_custom_call.1} parent=139 // pred_fallthru
          _
      $region140: #{tpu_custom_call.1} parent=5 // pred_fallthru
        _
    $region6: #{tpu_custom_call.1} parent=1 // loop_footer
      %s46 = sadd.s32 1, %s42
    $region7: #{tpu_custom_call.1} parent=1 // loop_footer_branch
      %41 = sbr.rel target = $region3
    $region8: #{tpu_custom_call.1} parent=1 // loop_exit
      _
    %2466 = vsyncpa [#allocation4], 1
    %s2467 = scalar_lea.sflag [#allocation4], 1
    %2468 = vsyncpa %s2467, 1
    %2469 = vsyncpa [#allocation7], 1
    %s2470 = scalar_lea.sflag [#allocation7], 1
    %2471 = vsyncpa %s2470, 1
    %2472 = vsyncpa [#allocation10], 1
    %s2473 = scalar_lea.sflag [#allocation10], 1
    %2474 = vsyncpa %s2473, 1
    %2475 = vsyncpa [#allocation13], 1
    %s2476 = scalar_lea.sflag [#allocation13], 1
    %2477 = vsyncpa %s2476, 1
    %2478 = vsyncpa [#allocation16], 1
    %s2479 = scalar_lea.sflag [#allocation16], 1
    %2480 = vsyncpa %s2479, 1
    %2481 = vsyncpa [#allocation19], 1
    %s2482 = scalar_lea.sflag [#allocation19], 1
    %2483 = vsyncpa %s2482, 1
    %2484 = vsyncpa [#allocation5], 1
    %s2485 = scalar_lea.sflag [#allocation5], 1
    %2486 = vsyncpa %s2485, 1

</llo_original>
